<compile_context>
chip_gen: v7x
topology: tpu7x:2x2x1
jax: 0.10.0
libtpu: 0.0.40
codegen_flags: <defaults>
</compile_context>

<pallas_src>
import functools

import jax
import jax.numpy as jnp
from jax.experimental import pallas as pl
from jax.experimental.pallas import tpu as pltpu


# ----------------------------- Pallas kernel ------------------------------ #

def _basic_block_kernel(*refs, stride, has_ds, Ho, Wo, Ci, Co, K1p, K2p):
    """Fully fused BasicBlock for one batch element (one grid step).

    Inputs (per step), in order:
      stride == 1 : x_pad (1, H+2, W+2, Ci) bf16
      stride == 2 : 4 parity phases of x_pad, each (1, Rh, Rw, Ci) bf16
      w1 (K1p, Co) bf16, b1 (1, Co) f32, w2 (K2p, Co) bf16, b2 (1, Co) f32,
      [wd (Ci, Co) bf16, bd (1, Co) f32]   (only when a downsample exists)
    Output : (1, Ho, Wo, Co) f32
    Scratch: mid (Ho+2, Wo+2, Co) f32 — conv1 activation with zero halo.
    """
    i = 0
    if stride == 1:
        x_ref = refs[i]; i += 1
        phase_refs = None
    else:
        phase_refs = refs[i:i + 4]; i += 4
    w1_ref, b1_ref, w2_ref, b2_ref = refs[i:i + 4]; i += 4
    if has_ds:
        wd_ref, bd_ref = refs[i:i + 2]; i += 2
    out_ref = refs[i]
    mid_ref = refs[i + 1]

    K1 = 9 * Ci
    K2 = 9 * Co

    # ---- conv1 taps (and the shortcut's input pixels), all in VMEM -------
    if stride == 1:
        xp = x_ref[0]                                    # (H+2, W+2, Ci) bf16
        taps1 = [xp[kh:kh + Ho, kw:kw + Wo, :]
                 for kh in range(3) for kw in range(3)]
        sc_src = xp[1:1 + Ho, 1:1 + Wo, :]               # unpadded input pixels
    else:  # stride == 2: unit-stride slices of the 4 parity phases
        ph = [[phase_refs[0][0], phase_refs[1][0]],
              [phase_refs[2][0], phase_refs[3][0]]]
        taps1 = [ph[kh % 2][kw % 2][kh // 2:kh // 2 + Ho,
                                    kw // 2:kw // 2 + Wo, :]
                 for kh in range(3) for kw in range(3)]
        sc_src = ph[1][1][:Ho, :Wo, :]                   # x[::2, ::2] pixels

    if K1p > K1:                                         # lane-dense K (VMEM only)
        taps1.append(jnp.zeros((Ho, Wo, K1p - K1), taps1[0].dtype))
    t1 = jnp.concatenate(taps1, axis=-1).reshape(Ho * Wo, K1p)

    # ---- conv1 + folded bn1 + relu: one deep-K MXU matmul, f32 epilogue ---
    a1 = jnp.dot(t1, w1_ref[...], preferred_element_type=jnp.float32)
    a1 = jnp.maximum(a1 + b1_ref[...], 0.0)

    # Stash the activation, spatially zero-padded, in VMEM scratch (never HBM).
    mid_ref[...] = jnp.zeros(mid_ref.shape, mid_ref.dtype)
    mid_ref[1:1 + Ho, 1:1 + Wo, :] = a1.reshape(Ho, Wo, Co)

    # ---- conv2 + folded bn2 (taps from the scratch; stride is always 1) ---
    mid = mid_ref[...]                                   # (Ho+2, Wo+2, Co) f32
    taps2 = [mid[kh:kh + Ho, kw:kw + Wo, :]
             for kh in range(3) for kw in range(3)]
    if K2p > K2:
        taps2.append(jnp.zeros((Ho, Wo, K2p - K2), mid.dtype))
    t2 = jnp.concatenate(taps2, axis=-1).reshape(Ho * Wo, K2p)
    t2 = t2.astype(jnp.bfloat16)
    a2 = jnp.dot(t2, w2_ref[...], preferred_element_type=jnp.float32)
    a2 = a2 + b2_ref[...]

    # ---- shortcut --------------------------------------------------------
    if has_ds:                                           # 1x1 conv + folded bn
        ident = jnp.dot(sc_src.reshape(Ho * Wo, Ci), wd_ref[...],
                        preferred_element_type=jnp.float32) + bd_ref[...]
    else:                                                # identity (Ci == Co)
        ident = sc_src.reshape(Ho * Wo, Ci).astype(jnp.float32)

    out = jnp.maximum(a2 + ident, 0.0)
    out_ref[0] = out.reshape(Ho, Wo, Co).astype(out_ref.dtype)


# ------------------------------ JAX wrappers ------------------------------ #

def _round_up(x, m):
    return (x + m - 1) // m * m


def fold_bn(gamma, beta, mean, var, eps=1e-5):
    scale = gamma / jnp.sqrt(var + eps)
    return scale, beta - mean * scale


def basic_block_forward(params, x_nchw, stride):
    if stride not in (1, 2):
        raise NotImplementedError("BasicBlock uses stride 1 or 2 only")
    x = jnp.transpose(x_nchw, (0, 2, 3, 1))              # NCHW -> NHWC
    N, H, W, Ci = x.shape
    Co = params["w1"].shape[-1]
    Ho = (H + 2 - 3) // stride + 1
    Wo = (W + 2 - 3) // stride + 1
    has_ds = (stride != 1) or (Ci != Co)

    K1, K2 = 9 * Ci, 9 * Co
    K1p, K2p = _round_up(K1, 128), _round_up(K2, 128)

    s1, b1 = fold_bn(params["bn1_g"], params["bn1_b"], params["bn1_m"], params["bn1_v"])
    s2, b2 = fold_bn(params["bn2_g"], params["bn2_b"], params["bn2_m"], params["bn2_v"])

    def fold_w(w, scale, kp):
        k = w.shape[0] * w.shape[1] * w.shape[2]
        wf = w.reshape(k, Co).astype(jnp.float32) * scale.astype(jnp.float32)[None, :]
        wf = jnp.pad(wf, ((0, kp - k), (0, 0)))          # zero rows for padded K
        return wf.astype(jnp.bfloat16)

    w1f = fold_w(params["w1"], s1, K1p)                  # (K1p, Co) bf16
    w2f = fold_w(params["w2"], s2, K2p)                  # (K2p, Co) bf16
    b1v = b1.astype(jnp.float32).reshape(1, Co)
    b2v = b2.astype(jnp.float32).reshape(1, Co)

    # Spatial zero-pad once; the input is the only tensor this block reads
    # from HBM (bf16 halves its bytes; intermediates never leave VMEM).
    xpad = jnp.pad(x, ((0, 0), (1, 1), (1, 1), (0, 0))).astype(jnp.bfloat16)

    if stride == 1:
        x_args = [xpad]
        x_specs = [pl.BlockSpec((1, H + 2, W + 2, Ci), lambda n: (n, 0, 0, 0))]
    else:
        # Split into the 4 (row, col) parity phases so all in-kernel taps of
        # the stride-2 conv are unit-stride slices.
        x_args, x_specs = [], []
        for a in range(2):
            for b in range(2):
                ph = xpad[:, a::2, b::2, :]
                x_args.append(ph)
                x_specs.append(pl.BlockSpec((1,) + ph.shape[1:],
                                            lambda n: (n, 0, 0, 0)))

    def const_spec(arr):
        idx = (0,) * arr.ndim
        return pl.BlockSpec(arr.shape, lambda n, _idx=idx: _idx)

    const_args = [w1f, b1v, w2f, b2v]
    if has_ds:
        sd, bd = fold_bn(params["bnd_g"], params["bnd_b"], params["bnd_m"], params["bnd_v"])
        wdf = (params["wd"].reshape(Ci, Co).astype(jnp.float32)
               * sd.astype(jnp.float32)[None, :]).astype(jnp.bfloat16)
        bdv = bd.astype(jnp.float32).reshape(1, Co)
        const_args += [wdf, bdv]

    args = x_args + const_args
    in_specs = x_specs + [const_spec(a) for a in const_args]

    # ---- per-step VMEM estimate -> scoped limit (kept <= v7x 64 MiB) ------
    x_block = sum(int(a.size) * a.dtype.itemsize for a in x_args) // N
    const_b = sum(int(a.size) * a.dtype.itemsize for a in const_args)
    out_block = Ho * Wo * Co * 4
    scratch_b = (Ho + 2) * (Wo + 2) * Co * 4
    temps = Ho * Wo * (K1p + K2p) * 2 * 2 + Ho * Wo * Co * 4 * 4
    vmem_est = 2 * (x_block + const_b + out_block) + scratch_b + temps
    vmem_limit = int(min(64 * 2**20, max(32 * 2**20, int(1.5 * vmem_est))))

    flops = 2 * N * Ho * Wo * Co * (K1p + K2p + (Ci if has_ds else 0))
    bytes_accessed = (sum(int(a.size) * a.dtype.itemsize for a in args)
                      + N * Ho * Wo * Co * 4)
    cost = pl.CostEstimate(flops=int(flops), transcendentals=0,
                           bytes_accessed=int(bytes_accessed))

    kernel = functools.partial(_basic_block_kernel, stride=stride, has_ds=has_ds,
                               Ho=Ho, Wo=Wo, Ci=Ci, Co=Co, K1p=K1p, K2p=K2p)

    out = pl.pallas_call(
        kernel,
        out_shape=jax.ShapeDtypeStruct((N, Ho, Wo, Co), jnp.float32),
        grid=(N,),
        in_specs=in_specs,
        out_specs=pl.BlockSpec((1, Ho, Wo, Co), lambda n: (n, 0, 0, 0)),
        scratch_shapes=[pltpu.VMEM((Ho + 2, Wo + 2, Co), jnp.float32)],
        compiler_params=pltpu.CompilerParams(
            dimension_semantics=("parallel",),
            vmem_limit_bytes=vmem_limit),
        cost_estimate=cost,
    )(*args)
    return jnp.transpose(out, (0, 3, 1, 2))              # NHWC -> NCHW


def init_basic_block_params(key, in_channels, out_channels, stride):
    ks = jax.random.split(key, 12)
    p = {
        "w1": 0.1 * jax.random.normal(ks[0], (3, 3, in_channels, out_channels), jnp.float32),
        "w2": 0.1 * jax.random.normal(ks[1], (3, 3, out_channels, out_channels), jnp.float32),
        "bn1_g": jax.random.uniform(ks[2], (out_channels,), jnp.float32, 0.5, 1.5),
        "bn1_b": 0.1 * jax.random.normal(ks[3], (out_channels,), jnp.float32),
        "bn1_m": 0.1 * jax.random.normal(ks[4], (out_channels,), jnp.float32),
        "bn1_v": jax.random.uniform(ks[5], (out_channels,), jnp.float32, 0.5, 1.5),
        "bn2_g": jax.random.uniform(ks[6], (out_channels,), jnp.float32, 0.5, 1.5),
        "bn2_b": 0.1 * jax.random.normal(ks[7], (out_channels,), jnp.float32),
        "bn2_m": 0.1 * jax.random.normal(ks[8], (out_channels,), jnp.float32),
        "bn2_v": jax.random.uniform(ks[9], (out_channels,), jnp.float32, 0.5, 1.5),
    }
    if stride != 1 or in_channels != out_channels:
        p["wd"] = 0.1 * jax.random.normal(ks[10], (1, 1, in_channels, out_channels), jnp.float32)
        p["bnd_g"] = jnp.ones((out_channels,), jnp.float32)
        p["bnd_b"] = jnp.zeros((out_channels,), jnp.float32)
        p["bnd_m"] = 0.1 * jax.random.normal(ks[11], (out_channels,), jnp.float32)
        p["bnd_v"] = jnp.ones((out_channels,), jnp.float32)
    return p


# --------------------------- pure-JAX reference ---------------------------- #

def _ref_conv(x_nhwc, w_hwio, stride, padding):
    return jax.lax.conv_general_dilated(
        x_nhwc, w_hwio, window_strides=(stride, stride),
        padding=[(padding, padding), (padding, padding)],
        dimension_numbers=("NHWC", "HWIO", "NHWC"))


def basic_block_reference(params, x_nchw, stride):
    x = jnp.transpose(x_nchw, (0, 2, 3, 1))
    Cin, Cout = x.shape[-1], params["w1"].shape[-1]
    s1, b1 = fold_bn(params["bn1_g"], params["bn1_b"], params["bn1_m"], params["bn1_v"])
    s2, b2 = fold_bn(params["bn2_g"], params["bn2_b"], params["bn2_m"], params["bn2_v"])
    if stride != 1 or Cin != Cout:
        sd, bd = fold_bn(params["bnd_g"], params["bnd_b"], params["bnd_m"], params["bnd_v"])
        identity = _ref_conv(x, params["wd"], stride, 0) * sd + bd
    else:
        identity = x
    out = jnp.maximum(_ref_conv(x, params["w1"], stride, 1) * s1 + b1, 0.0)
    out = _ref_conv(out, params["w2"], 1, 1) * s2 + b2
    out = jnp.maximum(out + identity, 0.0)
    return jnp.transpose(out, (0, 3, 1, 2))


# ---------------------------------- main ----------------------------------- #

if __name__ == "__main__":
    key = jax.random.PRNGKey(0)
    k_x, k_p1, k_p2 = jax.random.split(key, 3)

    # bf16 matmul operands with f32 accumulation -> loosened tolerance vs f32 ref.
    ATOL = RTOL = 5e-2

    x = jax.random.normal(k_x, (2, 4, 16, 16), jnp.float32)  # NCHW

    # Case 1: stride=2, in_channels != out_channels -> exercises downsample.
    params1 = init_basic_block_params(k_p1, in_channels=4, out_channels=8, stride=2)
    out1 = jax.block_until_ready(basic_block_forward(params1, x, stride=2))
    ref1 = basic_block_reference(params1, x, stride=2)
    assert out1.shape == (2, 8, 8, 8), out1.shape
    assert jnp.allclose(out1, ref1, atol=ATOL, rtol=RTOL), float(jnp.max(jnp.abs(out1 - ref1)))

    # Case 2: stride=1, in_channels == out_channels -> identity shortcut.
    params2 = init_basic_block_params(k_p2, in_channels=4, out_channels=4, stride=1)
    out2 = jax.block_until_ready(basic_block_forward(params2, x, stride=1))
    ref2 = basic_block_reference(params2, x, stride=1)
    assert out2.shape == (2, 4, 16, 16), out2.shape
    assert jnp.allclose(out2, ref2, atol=ATOL, rtol=RTOL), float(jnp.max(jnp.abs(out2 - ref2)))

    print("KERNEL_OK")
</pallas_src>

<mosaic_0001>
module attributes {stable_mosaic.version = 11 : i64} {
  func.func @_basic_block_kernel(%arg0: i32, %arg1: memref<1x9x9x4xbf16, #tpu.memory_space<vmem>>, %arg2: memref<1x9x9x4xbf16, #tpu.memory_space<vmem>>, %arg3: memref<1x9x9x4xbf16, #tpu.memory_space<vmem>>, %arg4: memref<1x9x9x4xbf16, #tpu.memory_space<vmem>>, %arg5: memref<128x8xbf16, #tpu.memory_space<vmem>>, %arg6: memref<1x8xf32, #tpu.memory_space<vmem>>, %arg7: memref<128x8xbf16, #tpu.memory_space<vmem>>, %arg8: memref<1x8xf32, #tpu.memory_space<vmem>>, %arg9: memref<4x8xbf16, #tpu.memory_space<vmem>>, %arg10: memref<1x8xf32, #tpu.memory_space<vmem>>, %arg11: memref<1x8x8x8xf32, #tpu.memory_space<vmem>>, %arg12: memref<10x10x8xf32, #tpu.memory_space<vmem>>) attributes {dimension_semantics = [#tpu.dimension_semantics<parallel>], iteration_bounds = array<i64: 2>, scalar_prefetch = 0 : i64, scratch_operands = 1 : i64, tpu.core_type = #tpu.core_type<tc>, window_params = [{transform_indices = @transform_0, window_bounds = array<i64: 1, 9, 9, 4>}, {transform_indices = @transform_1, window_bounds = array<i64: 1, 9, 9, 4>}, {transform_indices = @transform_2, window_bounds = array<i64: 1, 9, 9, 4>}, {transform_indices = @transform_3, window_bounds = array<i64: 1, 9, 9, 4>}, {pipeline_mode = #tpu.pipeline_mode<synchronous>, transform_indices = @transform_4, window_bounds = array<i64: 128, 8>}, {pipeline_mode = #tpu.pipeline_mode<synchronous>, transform_indices = @transform_5, window_bounds = array<i64: 1, 8>}, {pipeline_mode = #tpu.pipeline_mode<synchronous>, transform_indices = @transform_6, window_bounds = array<i64: 128, 8>}, {pipeline_mode = #tpu.pipeline_mode<synchronous>, transform_indices = @transform_7, window_bounds = array<i64: 1, 8>}, {pipeline_mode = #tpu.pipeline_mode<synchronous>, transform_indices = @transform_8, window_bounds = array<i64: 4, 8>}, {pipeline_mode = #tpu.pipeline_mode<synchronous>, transform_indices = @transform_9, window_bounds = array<i64: 1, 8>}, {transform_indices = @transform_10, window_bounds = array<i64: 1, 8, 8, 8>}]} {
    %c0 = arith.constant 0 : index
    %c0_0 = arith.constant 0 : index
    %c0_1 = arith.constant 0 : index
    %c0_2 = arith.constant 0 : index
    %0 = vector.load %arg1[%c0, %c0_0, %c0_1, %c0_2] : memref<1x9x9x4xbf16, #tpu.memory_space<vmem>>, vector<1x9x9x4xbf16>
    %1 = vector.shape_cast %0 : vector<1x9x9x4xbf16> to vector<9x9x4xbf16>
    %c0_3 = arith.constant 0 : index
    %c0_4 = arith.constant 0 : index
    %c0_5 = arith.constant 0 : index
    %c0_6 = arith.constant 0 : index
    %2 = vector.load %arg2[%c0_3, %c0_4, %c0_5, %c0_6] : memref<1x9x9x4xbf16, #tpu.memory_space<vmem>>, vector<1x9x9x4xbf16>
    %3 = vector.shape_cast %2 : vector<1x9x9x4xbf16> to vector<9x9x4xbf16>
    %c0_7 = arith.constant 0 : index
    %c0_8 = arith.constant 0 : index
    %c0_9 = arith.constant 0 : index
    %c0_10 = arith.constant 0 : index
    %4 = vector.load %arg3[%c0_7, %c0_8, %c0_9, %c0_10] : memref<1x9x9x4xbf16, #tpu.memory_space<vmem>>, vector<1x9x9x4xbf16>
    %5 = vector.shape_cast %4 : vector<1x9x9x4xbf16> to vector<9x9x4xbf16>
    %c0_11 = arith.constant 0 : index
    %c0_12 = arith.constant 0 : index
    %c0_13 = arith.constant 0 : index
    %c0_14 = arith.constant 0 : index
    %6 = vector.load %arg4[%c0_11, %c0_12, %c0_13, %c0_14] : memref<1x9x9x4xbf16, #tpu.memory_space<vmem>>, vector<1x9x9x4xbf16>
    %7 = vector.shape_cast %6 : vector<1x9x9x4xbf16> to vector<9x9x4xbf16>
    %8 = vector.extract_strided_slice %1 {offsets = [0, 0, 0], sizes = [8, 8, 4], strides = [1, 1, 1]} : vector<9x9x4xbf16> to vector<8x8x4xbf16>
    %9 = vector.extract_strided_slice %3 {offsets = [0, 0, 0], sizes = [8, 8, 4], strides = [1, 1, 1]} : vector<9x9x4xbf16> to vector<8x8x4xbf16>
    %10 = vector.extract_strided_slice %1 {offsets = [0, 1, 0], sizes = [8, 8, 4], strides = [1, 1, 1]} : vector<9x9x4xbf16> to vector<8x8x4xbf16>
    %11 = vector.extract_strided_slice %5 {offsets = [0, 0, 0], sizes = [8, 8, 4], strides = [1, 1, 1]} : vector<9x9x4xbf16> to vector<8x8x4xbf16>
    %12 = vector.extract_strided_slice %7 {offsets = [0, 0, 0], sizes = [8, 8, 4], strides = [1, 1, 1]} : vector<9x9x4xbf16> to vector<8x8x4xbf16>
    %13 = vector.extract_strided_slice %5 {offsets = [0, 1, 0], sizes = [8, 8, 4], strides = [1, 1, 1]} : vector<9x9x4xbf16> to vector<8x8x4xbf16>
    %14 = vector.extract_strided_slice %1 {offsets = [1, 0, 0], sizes = [8, 8, 4], strides = [1, 1, 1]} : vector<9x9x4xbf16> to vector<8x8x4xbf16>
    %15 = vector.extract_strided_slice %3 {offsets = [1, 0, 0], sizes = [8, 8, 4], strides = [1, 1, 1]} : vector<9x9x4xbf16> to vector<8x8x4xbf16>
    %16 = vector.extract_strided_slice %1 {offsets = [1, 1, 0], sizes = [8, 8, 4], strides = [1, 1, 1]} : vector<9x9x4xbf16> to vector<8x8x4xbf16>
    %17 = vector.extract_strided_slice %7 {offsets = [0, 0, 0], sizes = [8, 8, 4], strides = [1, 1, 1]} : vector<9x9x4xbf16> to vector<8x8x4xbf16>
    %cst = arith.constant 0.000000e+00 : bf16
    %18 = vector.broadcast %cst : bf16 to vector<8x8x92xbf16>
    %19 = tpu.concatenate %8, %9, %10, %11, %12, %13, %14, %15, %16, %18 in 2 : vector<8x8x4xbf16>, vector<8x8x4xbf16>, vector<8x8x4xbf16>, vector<8x8x4xbf16>, vector<8x8x4xbf16>, vector<8x8x4xbf16>, vector<8x8x4xbf16>, vector<8x8x4xbf16>, vector<8x8x4xbf16>, vector<8x8x92xbf16> -> vector<8x8x128xbf16>
    %20 = vector.shape_cast %19 : vector<8x8x128xbf16> to vector<64x128xbf16>
    %c0_15 = arith.constant 0 : index
    %c0_16 = arith.constant 0 : index
    %21 = vector.load %arg5[%c0_15, %c0_16] : memref<128x8xbf16, #tpu.memory_space<vmem>>, vector<128x8xbf16>
    %cst_17 = arith.constant dense<0.000000e+00> : vector<64x8xf32>
    %22 = tpu.matmul %20, %21, %cst_17 {dimension_numbers = #tpu.dot_dimension_numbers<[1], [0], [0], [1], [0, 0, 1, 1], [], []>} : vector<64x128xbf16>, vector<128x8xbf16>, vector<64x8xf32> -> vector<64x8xf32>
    %c0_18 = arith.constant 0 : index
    %c0_19 = arith.constant 0 : index
    %23 = vector.load %arg6[%c0_18, %c0_19] : memref<1x8xf32, #tpu.memory_space<vmem>>, vector<1x8xf32>
    %24 = vector.broadcast %23 : vector<1x8xf32> to vector<64x8xf32>
    %25 = arith.addf %22, %24 : vector<64x8xf32>
    %cst_20 = arith.constant 0.000000e+00 : f32
    %26 = vector.broadcast %cst_20 : f32 to vector<64x8xf32>
    %27 = arith.maximumf %25, %26 : vector<64x8xf32>
    %cst_21 = arith.constant 0.000000e+00 : f32
    %28 = vector.broadcast %cst_21 : f32 to vector<10x10x8xf32>
    %c0_22 = arith.constant 0 : index
    %c0_23 = arith.constant 0 : index
    %c0_24 = arith.constant 0 : index
    %29 = vector.load %arg12[%c0_22, %c0_23, %c0_24] : memref<10x10x8xf32, #tpu.memory_space<vmem>>, vector<10x10x8xf32>
    tpu.vector_store %arg12[%c0_22, %c0_23, %c0_24], %28 {strides = array<i32>} : memref<10x10x8xf32, #tpu.memory_space<vmem>>, vector<10x10x8xf32>,
    %30 = vector.shape_cast %27 : vector<64x8xf32> to vector<8x8x8xf32>
    %c1 = arith.constant 1 : index
    %c1_25 = arith.constant 1 : index
    %c0_26 = arith.constant 0 : index
    %31 = vector.load %arg12[%c1, %c1_25, %c0_26] : memref<10x10x8xf32, #tpu.memory_space<vmem>>, vector<8x8x8xf32>
    tpu.vector_store %arg12[%c1, %c1_25, %c0_26], %30 {strides = array<i32>} : memref<10x10x8xf32, #tpu.memory_space<vmem>>, vector<8x8x8xf32>,
    %c0_27 = arith.constant 0 : index
    %c0_28 = arith.constant 0 : index
    %c0_29 = arith.constant 0 : index
    %32 = vector.load %arg12[%c0_27, %c0_28, %c0_29] : memref<10x10x8xf32, #tpu.memory_space<vmem>>, vector<10x10x8xf32>
    %33 = vector.extract_strided_slice %32 {offsets = [0, 0, 0], sizes = [8, 8, 8], strides = [1, 1, 1]} : vector<10x10x8xf32> to vector<8x8x8xf32>
    %34 = vector.extract_strided_slice %32 {offsets = [0, 1, 0], sizes = [8, 8, 8], strides = [1, 1, 1]} : vector<10x10x8xf32> to vector<8x8x8xf32>
    %35 = vector.extract_strided_slice %32 {offsets = [0, 2, 0], sizes = [8, 8, 8], strides = [1, 1, 1]} : vector<10x10x8xf32> to vector<8x8x8xf32>
    %36 = vector.extract_strided_slice %32 {offsets = [1, 0, 0], sizes = [8, 8, 8], strides = [1, 1, 1]} : vector<10x10x8xf32> to vector<8x8x8xf32>
    %37 = vector.extract_strided_slice %32 {offsets = [1, 1, 0], sizes = [8, 8, 8], strides = [1, 1, 1]} : vector<10x10x8xf32> to vector<8x8x8xf32>
    %38 = vector.extract_strided_slice %32 {offsets = [1, 2, 0], sizes = [8, 8, 8], strides = [1, 1, 1]} : vector<10x10x8xf32> to vector<8x8x8xf32>
    %39 = vector.extract_strided_slice %32 {offsets = [2, 0, 0], sizes = [8, 8, 8], strides = [1, 1, 1]} : vector<10x10x8xf32> to vector<8x8x8xf32>
    %40 = vector.extract_strided_slice %32 {offsets = [2, 1, 0], sizes = [8, 8, 8], strides = [1, 1, 1]} : vector<10x10x8xf32> to vector<8x8x8xf32>
    %41 = vector.extract_strided_slice %32 {offsets = [2, 2, 0], sizes = [8, 8, 8], strides = [1, 1, 1]} : vector<10x10x8xf32> to vector<8x8x8xf32>
    %cst_30 = arith.constant 0.000000e+00 : f32
    %42 = vector.broadcast %cst_30 : f32 to vector<8x8x56xf32>
    %43 = tpu.concatenate %33, %34, %35, %36, %37, %38, %39, %40, %41, %42 in 2 : vector<8x8x8xf32>, vector<8x8x8xf32>, vector<8x8x8xf32>, vector<8x8x8xf32>, vector<8x8x8xf32>, vector<8x8x8xf32>, vector<8x8x8xf32>, vector<8x8x8xf32>, vector<8x8x8xf32>, vector<8x8x56xf32> -> vector<8x8x128xf32>
    %44 = vector.shape_cast %43 : vector<8x8x128xf32> to vector<64x128xf32>
    %45 = arith.truncf %44 : vector<64x128xf32> to vector<64x128xbf16>
    %c0_31 = arith.constant 0 : index
    %c0_32 = arith.constant 0 : index
    %46 = vector.load %arg7[%c0_31, %c0_32] : memref<128x8xbf16, #tpu.memory_space<vmem>>, vector<128x8xbf16>
    %cst_33 = arith.constant dense<0.000000e+00> : vector<64x8xf32>
    %47 = tpu.matmul %45, %46, %cst_33 {dimension_numbers = #tpu.dot_dimension_numbers<[1], [0], [0], [1], [0, 0, 1, 1], [], []>} : vector<64x128xbf16>, vector<128x8xbf16>, vector<64x8xf32> -> vector<64x8xf32>
    %c0_34 = arith.constant 0 : index
    %c0_35 = arith.constant 0 : index
    %48 = vector.load %arg8[%c0_34, %c0_35] : memref<1x8xf32, #tpu.memory_space<vmem>>, vector<1x8xf32>
    %49 = vector.broadcast %48 : vector<1x8xf32> to vector<64x8xf32>
    %50 = arith.addf %47, %49 : vector<64x8xf32>
    %51 = vector.shape_cast %17 : vector<8x8x4xbf16> to vector<64x4xbf16>
    %c0_36 = arith.constant 0 : index
    %c0_37 = arith.constant 0 : index
    %52 = vector.load %arg9[%c0_36, %c0_37] : memref<4x8xbf16, #tpu.memory_space<vmem>>, vector<4x8xbf16>
    %cst_38 = arith.constant dense<0.000000e+00> : vector<64x8xf32>
    %53 = tpu.matmul %51, %52, %cst_38 {dimension_numbers = #tpu.dot_dimension_numbers<[1], [0], [0], [1], [0, 0, 1, 1], [], []>} : vector<64x4xbf16>, vector<4x8xbf16>, vector<64x8xf32> -> vector<64x8xf32>
    %c0_39 = arith.constant 0 : index
    %c0_40 = arith.constant 0 : index
    %54 = vector.load %arg10[%c0_39, %c0_40] : memref<1x8xf32, #tpu.memory_space<vmem>>, vector<1x8xf32>
    %55 = vector.broadcast %54 : vector<1x8xf32> to vector<64x8xf32>
    %56 = arith.addf %53, %55 : vector<64x8xf32>
    %57 = arith.addf %50, %56 : vector<64x8xf32>
    %cst_41 = arith.constant 0.000000e+00 : f32
    %58 = vector.broadcast %cst_41 : f32 to vector<64x8xf32>
    %59 = arith.maximumf %57, %58 : vector<64x8xf32>
    %60 = vector.shape_cast %59 : vector<64x8xf32> to vector<8x8x8xf32>
    %c0_42 = arith.constant 0 : index
    %c0_43 = arith.constant 0 : index
    %c0_44 = arith.constant 0 : index
    %c0_45 = arith.constant 0 : index
    %61 = vector.load %arg11[%c0_42, %c0_43, %c0_44, %c0_45] : memref<1x8x8x8xf32, #tpu.memory_space<vmem>>, vector<1x8x8x8xf32>
    %62 = vector.shape_cast %61 : vector<1x8x8x8xf32> to vector<8x8x8xf32>
    %63 = vector.shape_cast %60 : vector<8x8x8xf32> to vector<1x8x8x8xf32>
    tpu.vector_store %arg11[%c0_42, %c0_43, %c0_44, %c0_45], %63 {strides = array<i32>} : memref<1x8x8x8xf32, #tpu.memory_space<vmem>>, vector<1x8x8x8xf32>,
    return
  }
  func.func @transform_0(%arg0: i32) -> (i32, i32, i32, i32) {
    %c0_i32 = arith.constant 0 : i32
    %c0_i32_0 = arith.constant 0 : i32
    %c0_i32_1 = arith.constant 0 : i32
    %c0_i32_2 = arith.constant 0 : i32
    return %arg0, %c0_i32, %c0_i32_0, %c0_i32_1 : i32, i32, i32, i32
  }
  func.func @transform_1(%arg0: i32) -> (i32, i32, i32, i32) {
    %c0_i32 = arith.constant 0 : i32
    %c0_i32_0 = arith.constant 0 : i32
    %c0_i32_1 = arith.constant 0 : i32
    %c0_i32_2 = arith.constant 0 : i32
    return %arg0, %c0_i32, %c0_i32_0, %c0_i32_1 : i32, i32, i32, i32
  }
  func.func @transform_2(%arg0: i32) -> (i32, i32, i32, i32) {
    %c0_i32 = arith.constant 0 : i32
    %c0_i32_0 = arith.constant 0 : i32
    %c0_i32_1 = arith.constant 0 : i32
    %c0_i32_2 = arith.constant 0 : i32
    return %arg0, %c0_i32, %c0_i32_0, %c0_i32_1 : i32, i32, i32, i32
  }
  func.func @transform_3(%arg0: i32) -> (i32, i32, i32, i32) {
    %c0_i32 = arith.constant 0 : i32
    %c0_i32_0 = arith.constant 0 : i32
    %c0_i32_1 = arith.constant 0 : i32
    %c0_i32_2 = arith.constant 0 : i32
    return %arg0, %c0_i32, %c0_i32_0, %c0_i32_1 : i32, i32, i32, i32
  }
  func.func @transform_4(%arg0: i32) -> (i32, i32) {
    %c0_i32 = arith.constant 0 : i32
    %c0_i32_0 = arith.constant 0 : i32
    %c0_i32_1 = arith.constant 0 : i32
    return %c0_i32, %c0_i32_0 : i32, i32
  }
  func.func @transform_5(%arg0: i32) -> (i32, i32) {
    %c0_i32 = arith.constant 0 : i32
    %c0_i32_0 = arith.constant 0 : i32
    %c0_i32_1 = arith.constant 0 : i32
    return %c0_i32, %c0_i32_0 : i32, i32
  }
  func.func @transform_6(%arg0: i32) -> (i32, i32) {
    %c0_i32 = arith.constant 0 : i32
    %c0_i32_0 = arith.constant 0 : i32
    %c0_i32_1 = arith.constant 0 : i32
    return %c0_i32, %c0_i32_0 : i32, i32
  }
  func.func @transform_7(%arg0: i32) -> (i32, i32) {
    %c0_i32 = arith.constant 0 : i32
    %c0_i32_0 = arith.constant 0 : i32
    %c0_i32_1 = arith.constant 0 : i32
    return %c0_i32, %c0_i32_0 : i32, i32
  }
  func.func @transform_8(%arg0: i32) -> (i32, i32) {
    %c0_i32 = arith.constant 0 : i32
    %c0_i32_0 = arith.constant 0 : i32
    %c0_i32_1 = arith.constant 0 : i32
    return %c0_i32, %c0_i32_0 : i32, i32
  }
  func.func @transform_9(%arg0: i32) -> (i32, i32) {
    %c0_i32 = arith.constant 0 : i32
    %c0_i32_0 = arith.constant 0 : i32
    %c0_i32_1 = arith.constant 0 : i32
    return %c0_i32, %c0_i32_0 : i32, i32
  }
  func.func @transform_10(%arg0: i32) -> (i32, i32, i32, i32) {
    %c0_i32 = arith.constant 0 : i32
    %c0_i32_0 = arith.constant 0 : i32
    %c0_i32_1 = arith.constant 0 : i32
    %c0_i32_2 = arith.constant 0 : i32
    return %arg0, %c0_i32, %c0_i32_0, %c0_i32_1 : i32, i32, i32, i32
  }
}

</mosaic_0001>

<llo_original>
// kernel: tpu_custom_call.1
$region0: #{tpu_custom_call.1}
  #allocation0 [shape = 'u32[]', space=smem, size = 0x4, offset = 0x4, fixed_abs, tag = 'smem constant byte address 0x4 - core index']
  #allocation1 [shape = 'u32[144,128]{1,0:T(1,128)}', space=vmem, size = 0x12000, scoped, tag = 'internal scratch']
  #allocation2 [shape = 'f32[10,10,8]{2,1,0:T(8,128)}', space=vmem, size = 0x14000, scoped, tag = 'scratch operand']
  %s0 = inlined_call_operand.vmem [shape: bf16[2,9,9,4], index: 0, kind: input, shape index: {}]
  %s1 = inlined_call_operand.vmem [shape: bf16[2,9,9,4], index: 1, kind: input, shape index: {}]
  %s2 = inlined_call_operand.vmem [shape: bf16[2,9,9,4], index: 2, kind: input, shape index: {}]
  %s3 = inlined_call_operand.vmem [shape: bf16[2,9,9,4], index: 3, kind: input, shape index: {}]
  %s4 = inlined_call_operand.vmem [shape: bf16[128,8], index: 4, kind: input, shape index: {}]
  %s5 = inlined_call_operand.vmem [shape: f32[1,8], index: 5, kind: input, shape index: {}]
  %s6 = inlined_call_operand.vmem [shape: bf16[128,8], index: 6, kind: input, shape index: {}]
  %s7 = inlined_call_operand.vmem [shape: f32[1,8], index: 7, kind: input, shape index: {}]
  %s8 = inlined_call_operand.vmem [shape: bf16[4,8], index: 8, kind: input, shape index: {}]
  %s9 = inlined_call_operand.vmem [shape: f32[1,8], index: 9, kind: input, shape index: {}]
  %s10 = inlined_call_operand.hbm [shape: f32[2,8,8,8], index: 10, kind: output, shape index: {}]
  %s11 = sld [smem:[#allocation0]]
  $region73: #{tpu_custom_call.1} parent=0
    _
  %s13 = ssub.s32 1, %s11
  %s14 = scalar_select 0, %s13, %s11
  $region1: #{tpu_custom_call.1} parent=0
    #allocation3 [shape = 'u8[65536]{0}', space=vmem, size = 0x10000, scoped, tag = 'output window, operand 0']
    #allocation4 [shape = 's32[2]{0}', space=sflag, size = 0x8, scoped, tag = 'scoped memory for tpu_custom_call.1']
    %15 = vsyncpa [#allocation4], 0
    %s16 = scalar_lea.sflag [#allocation4], 1
    %17 = vsyncpa %s16, 0
    loop: start=0, step=1, limit=4
    $region2: #{tpu_custom_call.1} parent=1 // loop_pre_header
      _
    $region3: #{tpu_custom_call.1} parent=1 // loop_header
      %s19 = sphi 0, %s23
      %p20 = scmp.ge.s32.totalorder %s19, 4
      %s29 = sphi 0, %s31
      %s32 = sphi 0, %s29
      %s33 = sphi 0, %s32
      %s49 = sphi 0, %s33
      %s55 = sphi 0, %s57
      %s58 = sphi 0, %s55
      %s59 = sphi 0, %s58
      %s75 = sphi 0, %s59
      %s81 = sphi 0, %s83
      %s84 = sphi 0, %s81
      %s85 = sphi 0, %s84
      %s101 = sphi 0, %s85
      %s107 = sphi 0, %s109
      %s110 = sphi 0, %s107
      %s111 = sphi 0, %s110
      %s127 = sphi 0, %s111
      %s131 = sphi 0, %s131
      %s133 = sphi 0, %s131
      %s134 = sphi 0, %s133
      %s148 = sphi 0, %s134
      %s152 = sphi 0, %s152
      %s154 = sphi 0, %s152
      %s155 = sphi 0, %s154
      %s169 = sphi 0, %s155
      %s173 = sphi 0, %s173
      %s175 = sphi 0, %s173
      %s176 = sphi 0, %s175
      %s190 = sphi 0, %s176
      %s194 = sphi 0, %s194
      %s196 = sphi 0, %s194
      %s197 = sphi 0, %s196
      %s211 = sphi 0, %s197
      %s215 = sphi 0, %s215
      %s217 = sphi 0, %s215
      %s218 = sphi 0, %s217
      %s232 = sphi 0, %s218
      %s236 = sphi 0, %s236
      %s238 = sphi 0, %s236
      %s239 = sphi 0, %s238
      %s253 = sphi 0, %s239
      %s259 = sphi 0, %s261
      %s262 = sphi 0, %s259
      %s263 = sphi 0, %s262
      %s279 = sphi 0, %s263
    $region4: #{tpu_custom_call.1} parent=1 // loop_header_branch
      %22 = sbr.rel (%p20) target = $region8
    $region5: #{tpu_custom_call.1} parent=1 // loop_body
      %s24 = ssub.s32 %s19, 1
      %s25 = ssub.s32 %s19, 2
      %s26 = sadd.s32 %s19, 1
      %s27 = ssub.s32 %s19, %s26
      %p28 = scmp.eq.s32.totalorder %s27, 0
      %s30 = sadd.s32 %s29, 1
      %s31 = scalar_select %p28, %s29, %s30
      %p34 = pneg %p28
      %p35 = scmp.eq.s32.totalorder %s19, 1
      %p36 = por %p34, %p35
      %p37 = scmp.ne.s32.totalorder %s29, %s32
      %p38 = scmp.eq.s32.totalorder %s19, 0
      %p39 = por %p37, %p38
      %p40 = scmp.ne.s32.totalorder %s29, %s32
      %p41 = scmp.eq.s32.totalorder %s24, 1
      %p42 = por %p40, %p41
      %p43 = scmp.ne.s32.totalorder %s32, %s33
      %p44 = scmp.eq.s32.totalorder %s24, 0
      %p45 = por %p43, %p44
      %p46 = scmp.ne.s32.totalorder %s32, %s33
      %p47 = scmp.eq.s32.totalorder %s25, 1
      %p48 = por %p46, %p47
      %p50 = scmp.ne.s32.totalorder %s33, %s49
      %p51 = scmp.eq.s32.totalorder %s25, 0
      %p52 = por %p50, %p51
      %s53 = ssub.s32 %s19, %s26
      %p54 = scmp.eq.s32.totalorder %s53, 0
      %s56 = sadd.s32 %s55, 1
      %s57 = scalar_select %p54, %s55, %s56
      %p60 = pneg %p54
      %p61 = scmp.eq.s32.totalorder %s19, 1
      %p62 = por %p60, %p61
      %p63 = scmp.ne.s32.totalorder %s55, %s58
      %p64 = scmp.eq.s32.totalorder %s19, 0
      %p65 = por %p63, %p64
      %p66 = scmp.ne.s32.totalorder %s55, %s58
      %p67 = scmp.eq.s32.totalorder %s24, 1
      %p68 = por %p66, %p67
      %p69 = scmp.ne.s32.totalorder %s58, %s59
      %p70 = scmp.eq.s32.totalorder %s24, 0
      %p71 = por %p69, %p70
      %p72 = scmp.ne.s32.totalorder %s58, %s59
      %p73 = scmp.eq.s32.totalorder %s25, 1
      %p74 = por %p72, %p73
      %p76 = scmp.ne.s32.totalorder %s59, %s75
      %p77 = scmp.eq.s32.totalorder %s25, 0
      %p78 = por %p76, %p77
      %s79 = ssub.s32 %s19, %s26
      %p80 = scmp.eq.s32.totalorder %s79, 0
      %s82 = sadd.s32 %s81, 1
      %s83 = scalar_select %p80, %s81, %s82
      %p86 = pneg %p80
      %p87 = scmp.eq.s32.totalorder %s19, 1
      %p88 = por %p86, %p87
      %p89 = scmp.ne.s32.totalorder %s81, %s84
      %p90 = scmp.eq.s32.totalorder %s19, 0
      %p91 = por %p89, %p90
      %p92 = scmp.ne.s32.totalorder %s81, %s84
      %p93 = scmp.eq.s32.totalorder %s24, 1
      %p94 = por %p92, %p93
      %p95 = scmp.ne.s32.totalorder %s84, %s85
      %p96 = scmp.eq.s32.totalorder %s24, 0
      %p97 = por %p95, %p96
      %p98 = scmp.ne.s32.totalorder %s84, %s85
      %p99 = scmp.eq.s32.totalorder %s25, 1
      %p100 = por %p98, %p99
      %p102 = scmp.ne.s32.totalorder %s85, %s101
      %p103 = scmp.eq.s32.totalorder %s25, 0
      %p104 = por %p102, %p103
      %s105 = ssub.s32 %s19, %s26
      %p106 = scmp.eq.s32.totalorder %s105, 0
      %s108 = sadd.s32 %s107, 1
      %s109 = scalar_select %p106, %s107, %s108
      %p112 = pneg %p106
      %p113 = scmp.eq.s32.totalorder %s19, 1
      %p114 = por %p112, %p113
      %p115 = scmp.ne.s32.totalorder %s107, %s110
      %p116 = scmp.eq.s32.totalorder %s19, 0
      %p117 = por %p115, %p116
      %p118 = scmp.ne.s32.totalorder %s107, %s110
      %p119 = scmp.eq.s32.totalorder %s24, 1
      %p120 = por %p118, %p119
      %p121 = scmp.ne.s32.totalorder %s110, %s111
      %p122 = scmp.eq.s32.totalorder %s24, 0
      %p123 = por %p121, %p122
      %p124 = scmp.ne.s32.totalorder %s110, %s111
      %p125 = scmp.eq.s32.totalorder %s25, 1
      %p126 = por %p124, %p125
      %p128 = scmp.ne.s32.totalorder %s111, %s127
      %p129 = scmp.eq.s32.totalorder %s25, 0
      %p130 = por %p128, %p129
      %s132 = sadd.s32 %s131, 1
      %p135 = scmp.eq.s32.totalorder %s19, 1
      %p136 = scmp.ne.s32.totalorder %s131, %s133
      %p137 = scmp.eq.s32.totalorder %s19, 0
      %p138 = por %p136, %p137
      %p139 = scmp.ne.s32.totalorder %s131, %s133
      %p140 = scmp.eq.s32.totalorder %s24, 1
      %p141 = por %p139, %p140
      %p142 = scmp.ne.s32.totalorder %s133, %s134
      %p143 = scmp.eq.s32.totalorder %s24, 0
      %p144 = por %p142, %p143
      %p145 = scmp.ne.s32.totalorder %s133, %s134
      %p146 = scmp.eq.s32.totalorder %s25, 1
      %p147 = por %p145, %p146
      %p149 = scmp.ne.s32.totalorder %s134, %s148
      %p150 = scmp.eq.s32.totalorder %s25, 0
      %p151 = por %p149, %p150
      %s153 = sadd.s32 %s152, 1
      %p156 = scmp.eq.s32.totalorder %s19, 1
      %p157 = scmp.ne.s32.totalorder %s152, %s154
      %p158 = scmp.eq.s32.totalorder %s19, 0
      %p159 = por %p157, %p158
      %p160 = scmp.ne.s32.totalorder %s152, %s154
      %p161 = scmp.eq.s32.totalorder %s24, 1
      %p162 = por %p160, %p161
      %p163 = scmp.ne.s32.totalorder %s154, %s155
      %p164 = scmp.eq.s32.totalorder %s24, 0
      %p165 = por %p163, %p164
      %p166 = scmp.ne.s32.totalorder %s154, %s155
      %p167 = scmp.eq.s32.totalorder %s25, 1
      %p168 = por %p166, %p167
      %p170 = scmp.ne.s32.totalorder %s155, %s169
      %p171 = scmp.eq.s32.totalorder %s25, 0
      %p172 = por %p170, %p171
      %s174 = sadd.s32 %s173, 1
      %p177 = scmp.eq.s32.totalorder %s19, 1
      %p178 = scmp.ne.s32.totalorder %s173, %s175
      %p179 = scmp.eq.s32.totalorder %s19, 0
      %p180 = por %p178, %p179
      %p181 = scmp.ne.s32.totalorder %s173, %s175
      %p182 = scmp.eq.s32.totalorder %s24, 1
      %p183 = por %p181, %p182
      %p184 = scmp.ne.s32.totalorder %s175, %s176
      %p185 = scmp.eq.s32.totalorder %s24, 0
      %p186 = por %p184, %p185
      %p187 = scmp.ne.s32.totalorder %s175, %s176
      %p188 = scmp.eq.s32.totalorder %s25, 1
      %p189 = por %p187, %p188
      %p191 = scmp.ne.s32.totalorder %s176, %s190
      %p192 = scmp.eq.s32.totalorder %s25, 0
      %p193 = por %p191, %p192
      %s195 = sadd.s32 %s194, 1
      %p198 = scmp.eq.s32.totalorder %s19, 1
      %p199 = scmp.ne.s32.totalorder %s194, %s196
      %p200 = scmp.eq.s32.totalorder %s19, 0
      %p201 = por %p199, %p200
      %p202 = scmp.ne.s32.totalorder %s194, %s196
      %p203 = scmp.eq.s32.totalorder %s24, 1
      %p204 = por %p202, %p203
      %p205 = scmp.ne.s32.totalorder %s196, %s197
      %p206 = scmp.eq.s32.totalorder %s24, 0
      %p207 = por %p205, %p206
      %p208 = scmp.ne.s32.totalorder %s196, %s197
      %p209 = scmp.eq.s32.totalorder %s25, 1
      %p210 = por %p208, %p209
      %p212 = scmp.ne.s32.totalorder %s197, %s211
      %p213 = scmp.eq.s32.totalorder %s25, 0
      %p214 = por %p212, %p213
      %s216 = sadd.s32 %s215, 1
      %p219 = scmp.eq.s32.totalorder %s19, 1
      %p220 = scmp.ne.s32.totalorder %s215, %s217
      %p221 = scmp.eq.s32.totalorder %s19, 0
      %p222 = por %p220, %p221
      %p223 = scmp.ne.s32.totalorder %s215, %s217
      %p224 = scmp.eq.s32.totalorder %s24, 1
      %p225 = por %p223, %p224
      %p226 = scmp.ne.s32.totalorder %s217, %s218
      %p227 = scmp.eq.s32.totalorder %s24, 0
      %p228 = por %p226, %p227
      %p229 = scmp.ne.s32.totalorder %s217, %s218
      %p230 = scmp.eq.s32.totalorder %s25, 1
      %p231 = por %p229, %p230
      %p233 = scmp.ne.s32.totalorder %s218, %s232
      %p234 = scmp.eq.s32.totalorder %s25, 0
      %p235 = por %p233, %p234
      %s237 = sadd.s32 %s236, 1
      %p240 = scmp.eq.s32.totalorder %s19, 1
      %p241 = scmp.ne.s32.totalorder %s236, %s238
      %p242 = scmp.eq.s32.totalorder %s19, 0
      %p243 = por %p241, %p242
      %p244 = scmp.ne.s32.totalorder %s236, %s238
      %p245 = scmp.eq.s32.totalorder %s24, 1
      %p246 = por %p244, %p245
      %p247 = scmp.ne.s32.totalorder %s238, %s239
      %p248 = scmp.eq.s32.totalorder %s24, 0
      %p249 = por %p247, %p248
      %p250 = scmp.ne.s32.totalorder %s238, %s239
      %p251 = scmp.eq.s32.totalorder %s25, 1
      %p252 = por %p250, %p251
      %p254 = scmp.ne.s32.totalorder %s239, %s253
      %p255 = scmp.eq.s32.totalorder %s25, 0
      %p256 = por %p254, %p255
      %s257 = ssub.s32 %s19, %s26
      %p258 = scmp.eq.s32.totalorder %s257, 0
      %s260 = sadd.s32 %s259, 1
      %s261 = scalar_select %p258, %s259, %s260
      %p264 = pneg %p258
      %p265 = scmp.eq.s32.totalorder %s19, 1
      %p266 = por %p264, %p265
      %p267 = scmp.ne.s32.totalorder %s259, %s262
      %p268 = scmp.eq.s32.totalorder %s19, 0
      %p269 = por %p267, %p268
      %p270 = scmp.ne.s32.totalorder %s259, %s262
      %p271 = scmp.eq.s32.totalorder %s24, 1
      %p272 = por %p270, %p271
      %p273 = scmp.ne.s32.totalorder %s262, %s263
      %p274 = scmp.eq.s32.totalorder %s24, 0
      %p275 = por %p273, %p274
      %p276 = scmp.ne.s32.totalorder %s262, %s263
      %p277 = scmp.eq.s32.totalorder %s25, 1
      %p278 = por %p276, %p277
      %p280 = scmp.ne.s32.totalorder %s263, %s279
      %p281 = scmp.eq.s32.totalorder %s25, 0
      %p282 = por %p280, %p281
      %p283 = scmp.le.s32.totalorder 1, %s19
      %p284 = scmp.lt.s32.totalorder %s19, 3
      %p285 = pnand %p283, %p284
      %p286 = pneg %p285
      // Predicated region
      $region9: #{tpu_custom_call.1} parent=5 // pred_check
        _
      $region10: #{tpu_custom_call.1} parent=5 // pred_check_branch
        %288 = sbr.rel (%p285) target = $region12
      $region11: #{tpu_custom_call.1} parent=5 // pred_region
        %s289 = ssub.s32 %s19, 1
        // Predicated region
        $region13: #{tpu_custom_call.1} parent=11 // pred_check
          %p290 = pneg %p144
        $region14: #{tpu_custom_call.1} parent=11 // pred_check_branch
          %292 = sbr.rel (%p290) target = $region16
        $region15: #{tpu_custom_call.1} parent=11 // pred_region
          _
        $region16: #{tpu_custom_call.1} parent=11 // pred_fallthru
          _
        // Predicated region
        $region17: #{tpu_custom_call.1} parent=11 // pred_check
          %p293 = pneg %p165
        $region18: #{tpu_custom_call.1} parent=11 // pred_check_branch
          %295 = sbr.rel (%p293) target = $region20
        $region19: #{tpu_custom_call.1} parent=11 // pred_region
          _
        $region20: #{tpu_custom_call.1} parent=11 // pred_fallthru
          _
        // Predicated region
        $region21: #{tpu_custom_call.1} parent=11 // pred_check
          %p296 = pneg %p186
        $region22: #{tpu_custom_call.1} parent=11 // pred_check_branch
          %298 = sbr.rel (%p296) target = $region24
        $region23: #{tpu_custom_call.1} parent=11 // pred_region
          _
        $region24: #{tpu_custom_call.1} parent=11 // pred_fallthru
          _
        // Predicated region
        $region25: #{tpu_custom_call.1} parent=11 // pred_check
          %p299 = pneg %p207
        $region26: #{tpu_custom_call.1} parent=11 // pred_check_branch
          %301 = sbr.rel (%p299) target = $region28
        $region27: #{tpu_custom_call.1} parent=11 // pred_region
          _
        $region28: #{tpu_custom_call.1} parent=11 // pred_fallthru
          _
        // Predicated region
        $region29: #{tpu_custom_call.1} parent=11 // pred_check
          %p302 = pneg %p228
        $region30: #{tpu_custom_call.1} parent=11 // pred_check_branch
          %304 = sbr.rel (%p302) target = $region32
        $region31: #{tpu_custom_call.1} parent=11 // pred_region
          _
        $region32: #{tpu_custom_call.1} parent=11 // pred_fallthru
          _
        // Predicated region
        $region33: #{tpu_custom_call.1} parent=11 // pred_check
          %p305 = pneg %p249
        $region34: #{tpu_custom_call.1} parent=11 // pred_check_branch
          %307 = sbr.rel (%p305) target = $region36
        $region35: #{tpu_custom_call.1} parent=11 // pred_region
          _
        $region36: #{tpu_custom_call.1} parent=11 // pred_fallthru
          _
      $region12: #{tpu_custom_call.1} parent=5 // pred_fallthru
        _
      %p308 = scmp.lt.s32.totalorder %s19, 2
      // Predicated region
      $region37: #{tpu_custom_call.1} parent=5 // pred_check
        %p309 = pneg %p308
      $region38: #{tpu_custom_call.1} parent=5 // pred_check_branch
        %311 = sbr.rel (%p309) target = $region40
      $region39: #{tpu_custom_call.1} parent=5 // pred_region
        // Predicated region
        $region41: #{tpu_custom_call.1} parent=39 // pred_check
          %p312 = pneg %p39
        $region42: #{tpu_custom_call.1} parent=39 // pred_check_branch
          %314 = sbr.rel (%p312) target = $region44
        $region43: #{tpu_custom_call.1} parent=39 // pred_region
          %p315 = scmp.lt.s32.totalorder %s19, 1
          %s316 = scalar_select %p315, %s19, 1
          %s317 = smul.addr %s316, 18
          %s318 = smul.addr %s317, 4
          %s319 = scalar_lea.vmem %s0, %s318
        $region44: #{tpu_custom_call.1} parent=39 // pred_fallthru
          _
        // Predicated region
        $region45: #{tpu_custom_call.1} parent=39 // pred_check
          %p320 = pneg %p65
        $region46: #{tpu_custom_call.1} parent=39 // pred_check_branch
          %322 = sbr.rel (%p320) target = $region48
        $region47: #{tpu_custom_call.1} parent=39 // pred_region
          %p323 = scmp.lt.s32.totalorder %s19, 1
          %s324 = scalar_select %p323, %s19, 1
          %s325 = smul.addr %s324, 18
          %s326 = smul.addr %s325, 4
          %s327 = scalar_lea.vmem %s1, %s326
        $region48: #{tpu_custom_call.1} parent=39 // pred_fallthru
          _
        // Predicated region
        $region49: #{tpu_custom_call.1} parent=39 // pred_check
          %p328 = pneg %p91
        $region50: #{tpu_custom_call.1} parent=39 // pred_check_branch
          %330 = sbr.rel (%p328) target = $region52
        $region51: #{tpu_custom_call.1} parent=39 // pred_region
          %p331 = scmp.lt.s32.totalorder %s19, 1
          %s332 = scalar_select %p331, %s19, 1
          %s333 = smul.addr %s332, 18
          %s334 = smul.addr %s333, 4
          %s335 = scalar_lea.vmem %s2, %s334
        $region52: #{tpu_custom_call.1} parent=39 // pred_fallthru
          _
        // Predicated region
        $region53: #{tpu_custom_call.1} parent=39 // pred_check
          %p336 = pneg %p117
        $region54: #{tpu_custom_call.1} parent=39 // pred_check_branch
          %338 = sbr.rel (%p336) target = $region56
        $region55: #{tpu_custom_call.1} parent=39 // pred_region
          %p339 = scmp.lt.s32.totalorder %s19, 1
          %s340 = scalar_select %p339, %s19, 1
          %s341 = smul.addr %s340, 18
          %s342 = smul.addr %s341, 4
          %s343 = scalar_lea.vmem %s3, %s342
        $region56: #{tpu_custom_call.1} parent=39 // pred_fallthru
          _
      $region40: #{tpu_custom_call.1} parent=5 // pred_fallthru
        _
      %p344 = scmp.le.s32.totalorder 1, %s19
      %p345 = scmp.lt.s32.totalorder %s19, 3
      %p346 = pnand %p344, %p345
      %p347 = pneg %p346
      // Predicated region
      $region57: #{tpu_custom_call.1} parent=5 // pred_check
        _
      $region58: #{tpu_custom_call.1} parent=5 // pred_check_branch
        %349 = sbr.rel (%p346) target = $region60
      $region59: #{tpu_custom_call.1} parent=5 // pred_region
        %s350 = ssub.s32 %s19, 1
        %p351 = scmp.lt.s32.totalorder %s24, 1
        %s352 = scalar_select %p351, %s24, 1
        %s353 = smul.addr %s352, 18
        %s354 = smul.addr %s353, 4
        %s355 = scalar_lea.vmem %s0, %s354
        %p356 = pneg %p45
        %p357 = pneg %p42
        %p358 = scmp.lt.s32.totalorder %s24, 1
        %s359 = scalar_select %p358, %s24, 1
        %s360 = smul.addr %s359, 18
        %s361 = smul.addr %s360, 4
        %s362 = scalar_lea.vmem %s1, %s361
        %p363 = pneg %p71
        %p364 = pneg %p68
        %p365 = scmp.lt.s32.totalorder %s24, 1
        %s366 = scalar_select %p365, %s24, 1
        %s367 = smul.addr %s366, 18
        %s368 = smul.addr %s367, 4
        %s369 = scalar_lea.vmem %s2, %s368
        %p370 = pneg %p97
        %p371 = pneg %p94
        %p372 = scmp.lt.s32.totalorder %s24, 1
        %s373 = scalar_select %p372, %s24, 1
        %s374 = smul.addr %s373, 18
        %s375 = smul.addr %s374, 4
        %s376 = scalar_lea.vmem %s3, %s375
        %p377 = pneg %p123
        %p378 = pneg %p120
        %p379 = pneg %p144
        %p380 = pneg %p141
        %p381 = pneg %p165
        %p382 = pneg %p162
        %p383 = pneg %p186
        %p384 = pneg %p183
        %p385 = pneg %p207
        %p386 = pneg %p204
        %p387 = pneg %p228
        %p388 = pneg %p225
        %p389 = pneg %p249
        %p390 = pneg %p246
        %p391 = pneg %p275
        %p392 = pneg %p272
        %s393 = sand.u32 %s262, 1
        %s394 = scalar_lea.sflag [#allocation4], %s393
        %s395 = sand.u32 %s262, 1
        %s396 = smul.addr %s395, 64
        %s397 = scalar_lea.vmem [#allocation3], %s396
        %p398 = scmp.lt.s32.totalorder %s24, 1
        %s399 = scalar_select %p398, %s24, 1
        %s400 = smul.addr %s399, 18
        %s401 = smul.addr %s400, 4
        %s402 = scalar_lea.vmem %s0, %s401
        %p403 = scmp.lt.s32.totalorder %s24, 1
        %s404 = scalar_select %p403, %s24, 1
        %s405 = smul.addr %s404, 18
        %s406 = smul.addr %s405, 4
        %s407 = scalar_lea.vmem %s1, %s406
        %p408 = scmp.lt.s32.totalorder %s24, 1
        %s409 = scalar_select %p408, %s24, 1
        %s410 = smul.addr %s409, 18
        %s411 = smul.addr %s410, 4
        %s412 = scalar_lea.vmem %s2, %s411
        %p413 = scmp.lt.s32.totalorder %s24, 1
        %s414 = scalar_select %p413, %s24, 1
        %s415 = smul.addr %s414, 18
        %s416 = smul.addr %s415, 4
        %s417 = scalar_lea.vmem %s3, %s416
        %v419 = vld [vmem:[%s402] sm:$0xf]
        %v420 = vld [vmem:[%s402 + $0x4] sm:$0x1]
        %v421 = vld [vmem:[%s402 + $0x8] sm:$0xf]
        %v422 = vld [vmem:[%s402 + $0xc] sm:$0x1]
        %v423 = vld [vmem:[%s402 + $0x10] sm:$0xf]
        %v424 = vld [vmem:[%s402 + $0x14] sm:$0x1]
        %v425 = vld [vmem:[%s402 + $0x18] sm:$0xf]
        %v426 = vld [vmem:[%s402 + $0x1c] sm:$0x1]
        %v427 = vld [vmem:[%s402 + $0x20] sm:$0xf]
        %v428 = vld [vmem:[%s402 + $0x24] sm:$0x1]
        %v429 = vld [vmem:[%s402 + $0x28] sm:$0xf]
        %v430 = vld [vmem:[%s402 + $0x2c] sm:$0x1]
        %v431 = vld [vmem:[%s402 + $0x30] sm:$0xf]
        %v432 = vld [vmem:[%s402 + $0x34] sm:$0x1]
        %v433 = vld [vmem:[%s402 + $0x38] sm:$0xf]
        %v434 = vld [vmem:[%s402 + $0x3c] sm:$0x1]
        %v435 = vld [vmem:[%s402 + $0x40] sm:$0xf]
        %v436 = vld [vmem:[%s402 + $0x44] sm:$0x1]
        %v437 = vld [vmem:[%s407] sm:$0xf]
        %v438 = vld [vmem:[%s407 + $0x8] sm:$0xf]
        %v439 = vld [vmem:[%s407 + $0x10] sm:$0xf]
        %v440 = vld [vmem:[%s407 + $0x18] sm:$0xf]
        %v441 = vld [vmem:[%s407 + $0x20] sm:$0xf]
        %v442 = vld [vmem:[%s407 + $0x28] sm:$0xf]
        %v443 = vld [vmem:[%s407 + $0x30] sm:$0xf]
        %v444 = vld [vmem:[%s407 + $0x38] sm:$0xf]
        %v445 = vld [vmem:[%s407 + $0x40] sm:$0xf]
        %v446 = vld [vmem:[%s412] sm:$0xf]
        %v447 = vld [vmem:[%s412 + $0x4] sm:$0x1]
        %v448 = vld [vmem:[%s412 + $0x8] sm:$0xf]
        %v449 = vld [vmem:[%s412 + $0xc] sm:$0x1]
        %v450 = vld [vmem:[%s412 + $0x10] sm:$0xf]
        %v451 = vld [vmem:[%s412 + $0x14] sm:$0x1]
        %v452 = vld [vmem:[%s412 + $0x18] sm:$0xf]
        %v453 = vld [vmem:[%s412 + $0x1c] sm:$0x1]
        %v454 = vld [vmem:[%s412 + $0x20] sm:$0xf]
        %v455 = vld [vmem:[%s412 + $0x24] sm:$0x1]
        %v456 = vld [vmem:[%s412 + $0x28] sm:$0xf]
        %v457 = vld [vmem:[%s412 + $0x2c] sm:$0x1]
        %v458 = vld [vmem:[%s412 + $0x30] sm:$0xf]
        %v459 = vld [vmem:[%s412 + $0x34] sm:$0x1]
        %v460 = vld [vmem:[%s412 + $0x38] sm:$0xf]
        %v461 = vld [vmem:[%s412 + $0x3c] sm:$0x1]
        %v462 = vld [vmem:[%s417] sm:$0xf]
        %v463 = vld [vmem:[%s417 + $0x8] sm:$0xf]
        %v464 = vld [vmem:[%s417 + $0x10] sm:$0xf]
        %v465 = vld [vmem:[%s417 + $0x18] sm:$0xf]
        %v466 = vld [vmem:[%s417 + $0x20] sm:$0xf]
        %v467 = vld [vmem:[%s417 + $0x28] sm:$0xf]
        %v468 = vld [vmem:[%s417 + $0x30] sm:$0xf]
        %v469 = vld [vmem:[%s417 + $0x38] sm:$0xf]
        %v478 = vunpack.c.l.b16 %v437
        %v479 = vunpack.c.l.b16 %v438
        %v480 = vunpack.c.l.b16 %v439
        %v481 = vunpack.c.l.b16 %v440
        %v482 = vunpack.c.l.b16 %v441
        %v483 = vunpack.c.l.b16 %v442
        %v484 = vunpack.c.l.b16 %v443
        %v485 = vunpack.c.l.b16 %v444
        %v486 = vpack.c.b16 %v478, %v478
        %v487 = vpack.c.b16 %v479, %v479
        %v488 = vpack.c.b16 %v480, %v480
        %v489 = vpack.c.b16 %v481, %v481
        %v490 = vpack.c.b16 %v482, %v482
        %v491 = vpack.c.b16 %v483, %v483
        %v492 = vpack.c.b16 %v484, %v484
        %v493 = vpack.c.b16 %v485, %v485
        %494 = vrot.lane.b32.xlu0 %v486, 4
        %v495 = vpop.permute.xlu0 %494
        %496 = vrot.lane.b32.xlu0 %v487, 4
        %v497 = vpop.permute.xlu0 %496
        %498 = vrot.lane.b32.xlu0 %v488, 4
        %v499 = vpop.permute.xlu0 %498
        %500 = vrot.lane.b32.xlu0 %v489, 4
        %v501 = vpop.permute.xlu0 %500
        %502 = vrot.lane.b32.xlu0 %v490, 4
        %v503 = vpop.permute.xlu0 %502
        %504 = vrot.lane.b32.xlu0 %v491, 4
        %v505 = vpop.permute.xlu0 %504
        %506 = vrot.lane.b32.xlu0 %v492, 4
        %v507 = vpop.permute.xlu0 %506
        %508 = vrot.lane.b32.xlu0 %v493, 4
        %v509 = vpop.permute.xlu0 %508
        %v526 = vunpack.c.l.b16 %v419
        %v527 = vunpack.c.l.b16 %v420
        %v528 = vunpack.c.l.b16 %v421
        %v529 = vunpack.c.l.b16 %v422
        %v530 = vunpack.c.l.b16 %v423
        %v531 = vunpack.c.l.b16 %v424
        %v532 = vunpack.c.l.b16 %v425
        %v533 = vunpack.c.l.b16 %v426
        %v534 = vunpack.c.l.b16 %v427
        %v535 = vunpack.c.l.b16 %v428
        %v536 = vunpack.c.l.b16 %v429
        %v537 = vunpack.c.l.b16 %v430
        %v538 = vunpack.c.l.b16 %v431
        %v539 = vunpack.c.l.b16 %v432
        %v540 = vunpack.c.l.b16 %v433
        %v541 = vunpack.c.l.b16 %v434
        %v542 = vpack.c.b16 %v527, %v526
        %v543 = vpack.c.b16 %v529, %v528
        %v544 = vpack.c.b16 %v531, %v530
        %v545 = vpack.c.b16 %v533, %v532
        %v546 = vpack.c.b16 %v535, %v534
        %v547 = vpack.c.b16 %v537, %v536
        %v548 = vpack.c.b16 %v539, %v538
        %v549 = vpack.c.b16 %v541, %v540
        %v551 = vshrl.u32 %v542, 16
        %v553 = vshll.u32 %v542, 16
        %v555 = vrot.slane %v553, 1
        %v556 = vor.u32 %v551, %v555
        %v558 = vshrl.u32 %v543, 16
        %v560 = vshll.u32 %v543, 16
        %v562 = vrot.slane %v560, 1
        %v563 = vor.u32 %v558, %v562
        %v565 = vshrl.u32 %v544, 16
        %v567 = vshll.u32 %v544, 16
        %v569 = vrot.slane %v567, 1
        %v570 = vor.u32 %v565, %v569
        %v572 = vshrl.u32 %v545, 16
        %v574 = vshll.u32 %v545, 16
        %v576 = vrot.slane %v574, 1
        %v577 = vor.u32 %v572, %v576
        %v579 = vshrl.u32 %v546, 16
        %v581 = vshll.u32 %v546, 16
        %v583 = vrot.slane %v581, 1
        %v584 = vor.u32 %v579, %v583
        %v586 = vshrl.u32 %v547, 16
        %v588 = vshll.u32 %v547, 16
        %v590 = vrot.slane %v588, 1
        %v591 = vor.u32 %v586, %v590
        %v593 = vshrl.u32 %v548, 16
        %v595 = vshll.u32 %v548, 16
        %v597 = vrot.slane %v595, 1
        %v598 = vor.u32 %v593, %v597
        %v600 = vshrl.u32 %v549, 16
        %v602 = vshll.u32 %v549, 16
        %v604 = vrot.slane %v602, 1
        %v605 = vor.u32 %v600, %v604
        %606 = vrot.lane.b32.xlu0 %v556, 8
        %v607 = vpop.permute.xlu0 %606
        %608 = vrot.lane.b32.xlu0 %v563, 8
        %v609 = vpop.permute.xlu0 %608
        %610 = vrot.lane.b32.xlu0 %v570, 8
        %v611 = vpop.permute.xlu0 %610
        %612 = vrot.lane.b32.xlu0 %v577, 8
        %v613 = vpop.permute.xlu0 %612
        %614 = vrot.lane.b32.xlu0 %v584, 8
        %v615 = vpop.permute.xlu0 %614
        %616 = vrot.lane.b32.xlu0 %v591, 8
        %v617 = vpop.permute.xlu0 %616
        %618 = vrot.lane.b32.xlu0 %v598, 8
        %v619 = vpop.permute.xlu0 %618
        %620 = vrot.lane.b32.xlu0 %v605, 8
        %v621 = vpop.permute.xlu0 %620
        %v630 = vunpack.c.l.b16 %v446
        %v631 = vunpack.c.l.b16 %v448
        %v632 = vunpack.c.l.b16 %v450
        %v633 = vunpack.c.l.b16 %v452
        %v634 = vunpack.c.l.b16 %v454
        %v635 = vunpack.c.l.b16 %v456
        %v636 = vunpack.c.l.b16 %v458
        %v637 = vunpack.c.l.b16 %v460
        %v638 = vpack.c.b16 %v630, %v630
        %v639 = vpack.c.b16 %v631, %v631
        %v640 = vpack.c.b16 %v632, %v632
        %v641 = vpack.c.b16 %v633, %v633
        %v642 = vpack.c.b16 %v634, %v634
        %v643 = vpack.c.b16 %v635, %v635
        %v644 = vpack.c.b16 %v636, %v636
        %v645 = vpack.c.b16 %v637, %v637
        %646 = vrot.lane.b32.xlu0 %v638, 12
        %v647 = vpop.permute.xlu0 %646
        %648 = vrot.lane.b32.xlu0 %v639, 12
        %v649 = vpop.permute.xlu0 %648
        %650 = vrot.lane.b32.xlu0 %v640, 12
        %v651 = vpop.permute.xlu0 %650
        %652 = vrot.lane.b32.xlu0 %v641, 12
        %v653 = vpop.permute.xlu0 %652
        %654 = vrot.lane.b32.xlu0 %v642, 12
        %v655 = vpop.permute.xlu0 %654
        %656 = vrot.lane.b32.xlu0 %v643, 12
        %v657 = vpop.permute.xlu0 %656
        %658 = vrot.lane.b32.xlu0 %v644, 12
        %v659 = vpop.permute.xlu0 %658
        %660 = vrot.lane.b32.xlu0 %v645, 12
        %v661 = vpop.permute.xlu0 %660
        %v670 = vunpack.c.l.b16 %v462
        %v671 = vunpack.c.l.b16 %v463
        %v672 = vunpack.c.l.b16 %v464
        %v673 = vunpack.c.l.b16 %v465
        %v674 = vunpack.c.l.b16 %v466
        %v675 = vunpack.c.l.b16 %v467
        %v676 = vunpack.c.l.b16 %v468
        %v677 = vunpack.c.l.b16 %v469
        %v678 = vpack.c.b16 %v670, %v670
        %v679 = vpack.c.b16 %v671, %v671
        %v680 = vpack.c.b16 %v672, %v672
        %v681 = vpack.c.b16 %v673, %v673
        %v682 = vpack.c.b16 %v674, %v674
        %v683 = vpack.c.b16 %v675, %v675
        %v684 = vpack.c.b16 %v676, %v676
        %v685 = vpack.c.b16 %v677, %v677
        %686 = vrot.lane.b32.xlu0 %v678, 16
        %v687 = vpop.permute.xlu0 %686
        %688 = vrot.lane.b32.xlu0 %v679, 16
        %v689 = vpop.permute.xlu0 %688
        %690 = vrot.lane.b32.xlu0 %v680, 16
        %v691 = vpop.permute.xlu0 %690
        %692 = vrot.lane.b32.xlu0 %v681, 16
        %v693 = vpop.permute.xlu0 %692
        %694 = vrot.lane.b32.xlu0 %v682, 16
        %v695 = vpop.permute.xlu0 %694
        %696 = vrot.lane.b32.xlu0 %v683, 16
        %v697 = vpop.permute.xlu0 %696
        %698 = vrot.lane.b32.xlu0 %v684, 16
        %v699 = vpop.permute.xlu0 %698
        %700 = vrot.lane.b32.xlu0 %v685, 16
        %v701 = vpop.permute.xlu0 %700
        %v710 = vunpack.c.l.b16 %v447
        %v711 = vunpack.c.l.b16 %v449
        %v712 = vunpack.c.l.b16 %v451
        %v713 = vunpack.c.l.b16 %v453
        %v714 = vunpack.c.l.b16 %v455
        %v715 = vunpack.c.l.b16 %v457
        %v716 = vunpack.c.l.b16 %v459
        %v717 = vunpack.c.l.b16 %v461
        %v718 = vpack.c.b16 %v710, %v630
        %v719 = vpack.c.b16 %v711, %v631
        %v720 = vpack.c.b16 %v712, %v632
        %v721 = vpack.c.b16 %v713, %v633
        %v722 = vpack.c.b16 %v714, %v634
        %v723 = vpack.c.b16 %v715, %v635
        %v724 = vpack.c.b16 %v716, %v636
        %v725 = vpack.c.b16 %v717, %v637
        %v727 = vshrl.u32 %v718, 16
        %v729 = vshll.u32 %v718, 16
        %v731 = vrot.slane %v729, 1
        %v732 = vor.u32 %v727, %v731
        %v734 = vshrl.u32 %v719, 16
        %v736 = vshll.u32 %v719, 16
        %v738 = vrot.slane %v736, 1
        %v739 = vor.u32 %v734, %v738
        %v741 = vshrl.u32 %v720, 16
        %v743 = vshll.u32 %v720, 16
        %v745 = vrot.slane %v743, 1
        %v746 = vor.u32 %v741, %v745
        %v748 = vshrl.u32 %v721, 16
        %v750 = vshll.u32 %v721, 16
        %v752 = vrot.slane %v750, 1
        %v753 = vor.u32 %v748, %v752
        %v755 = vshrl.u32 %v722, 16
        %v757 = vshll.u32 %v722, 16
        %v759 = vrot.slane %v757, 1
        %v760 = vor.u32 %v755, %v759
        %v762 = vshrl.u32 %v723, 16
        %v764 = vshll.u32 %v723, 16
        %v766 = vrot.slane %v764, 1
        %v767 = vor.u32 %v762, %v766
        %v769 = vshrl.u32 %v724, 16
        %v771 = vshll.u32 %v724, 16
        %v773 = vrot.slane %v771, 1
        %v774 = vor.u32 %v769, %v773
        %v776 = vshrl.u32 %v725, 16
        %v778 = vshll.u32 %v725, 16
        %v780 = vrot.slane %v778, 1
        %v781 = vor.u32 %v776, %v780
        %782 = vrot.lane.b32.xlu0 %v732, 20
        %v783 = vpop.permute.xlu0 %782
        %784 = vrot.lane.b32.xlu0 %v739, 20
        %v785 = vpop.permute.xlu0 %784
        %786 = vrot.lane.b32.xlu0 %v746, 20
        %v787 = vpop.permute.xlu0 %786
        %788 = vrot.lane.b32.xlu0 %v753, 20
        %v789 = vpop.permute.xlu0 %788
        %790 = vrot.lane.b32.xlu0 %v760, 20
        %v791 = vpop.permute.xlu0 %790
        %792 = vrot.lane.b32.xlu0 %v767, 20
        %v793 = vpop.permute.xlu0 %792
        %794 = vrot.lane.b32.xlu0 %v774, 20
        %v795 = vpop.permute.xlu0 %794
        %796 = vrot.lane.b32.xlu0 %v781, 20
        %v797 = vpop.permute.xlu0 %796
        %v799 = vunpack.c.l.b16 %v435
        %v800 = vpack.c.b16 %v528, %v528
        %v801 = vpack.c.b16 %v530, %v530
        %v802 = vpack.c.b16 %v532, %v532
        %v803 = vpack.c.b16 %v534, %v534
        %v804 = vpack.c.b16 %v536, %v536
        %v805 = vpack.c.b16 %v538, %v538
        %v806 = vpack.c.b16 %v540, %v540
        %v807 = vpack.c.b16 %v799, %v799
        %808 = vrot.lane.b32.xlu0 %v800, 24
        %v809 = vpop.permute.xlu0 %808
        %810 = vrot.lane.b32.xlu0 %v801, 24
        %v811 = vpop.permute.xlu0 %810
        %812 = vrot.lane.b32.xlu0 %v802, 24
        %v813 = vpop.permute.xlu0 %812
        %814 = vrot.lane.b32.xlu0 %v803, 24
        %v815 = vpop.permute.xlu0 %814
        %816 = vrot.lane.b32.xlu0 %v804, 24
        %v817 = vpop.permute.xlu0 %816
        %818 = vrot.lane.b32.xlu0 %v805, 24
        %v819 = vpop.permute.xlu0 %818
        %820 = vrot.lane.b32.xlu0 %v806, 24
        %v821 = vpop.permute.xlu0 %820
        %822 = vrot.lane.b32.xlu0 %v807, 24
        %v823 = vpop.permute.xlu0 %822
        %v825 = vunpack.c.l.b16 %v445
        %v826 = vpack.c.b16 %v825, %v825
        %827 = vrot.lane.b32.xlu0 %v487, 28
        %v828 = vpop.permute.xlu0 %827
        %829 = vrot.lane.b32.xlu0 %v488, 28
        %v830 = vpop.permute.xlu0 %829
        %831 = vrot.lane.b32.xlu0 %v489, 28
        %v832 = vpop.permute.xlu0 %831
        %833 = vrot.lane.b32.xlu0 %v490, 28
        %v834 = vpop.permute.xlu0 %833
        %835 = vrot.lane.b32.xlu0 %v491, 28
        %v836 = vpop.permute.xlu0 %835
        %837 = vrot.lane.b32.xlu0 %v492, 28
        %v838 = vpop.permute.xlu0 %837
        %839 = vrot.lane.b32.xlu0 %v493, 28
        %v840 = vpop.permute.xlu0 %839
        %841 = vrot.lane.b32.xlu0 %v826, 28
        %v842 = vpop.permute.xlu0 %841
        %v844 = vunpack.c.l.b16 %v436
        %v845 = vpack.c.b16 %v844, %v799
        %v847 = vshrl.u32 %v845, 16
        %v849 = vshll.u32 %v845, 16
        %v851 = vrot.slane %v849, 1
        %v852 = vor.u32 %v847, %v851
        %853 = vrot.lane.b32.xlu0 %v563, 32
        %v854 = vpop.permute.xlu0 %853
        %855 = vrot.lane.b32.xlu0 %v570, 32
        %v856 = vpop.permute.xlu0 %855
        %857 = vrot.lane.b32.xlu0 %v577, 32
        %v858 = vpop.permute.xlu0 %857
        %859 = vrot.lane.b32.xlu0 %v584, 32
        %v860 = vpop.permute.xlu0 %859
        %861 = vrot.lane.b32.xlu0 %v591, 32
        %v862 = vpop.permute.xlu0 %861
        %863 = vrot.lane.b32.xlu0 %v598, 32
        %v864 = vpop.permute.xlu0 %863
        %865 = vrot.lane.b32.xlu0 %v605, 32
        %v866 = vpop.permute.xlu0 %865
        %867 = vrot.lane.b32.xlu0 %v852, 32
        %v868 = vpop.permute.xlu0 %867
        %vm869 = vcmask 31744
        %v872 = vsel %vm869, %v419, %v495
        %v875 = vsel %vm869, %v421, %v497
        %v878 = vsel %vm869, %v423, %v499
        %v881 = vsel %vm869, %v425, %v501
        %v884 = vsel %vm869, %v427, %v503
        %v887 = vsel %vm869, %v429, %v505
        %v890 = vsel %vm869, %v431, %v507
        %v893 = vsel %vm869, %v433, %v509
        %vm894 = vcmask 64512
        %v896 = vsel %vm894, %v872, %v607
        %v898 = vsel %vm894, %v875, %v609
        %v900 = vsel %vm894, %v878, %v611
        %v902 = vsel %vm894, %v881, %v613
        %v904 = vsel %vm894, %v884, %v615
        %v906 = vsel %vm894, %v887, %v617
        %v908 = vsel %vm894, %v890, %v619
        %v910 = vsel %vm894, %v893, %v621
        %vm911 = vcmask 97280
        %v913 = vsel %vm911, %v896, %v647
        %v915 = vsel %vm911, %v898, %v649
        %v917 = vsel %vm911, %v900, %v651
        %v919 = vsel %vm911, %v902, %v653
        %v921 = vsel %vm911, %v904, %v655
        %v923 = vsel %vm911, %v906, %v657
        %v925 = vsel %vm911, %v908, %v659
        %v927 = vsel %vm911, %v910, %v661
        %vm928 = vcmask 130048
        %v930 = vsel %vm928, %v913, %v687
        %v932 = vsel %vm928, %v915, %v689
        %v934 = vsel %vm928, %v917, %v691
        %v936 = vsel %vm928, %v919, %v693
        %v938 = vsel %vm928, %v921, %v695
        %v940 = vsel %vm928, %v923, %v697
        %v942 = vsel %vm928, %v925, %v699
        %v944 = vsel %vm928, %v927, %v701
        %vm945 = vcmask 162816
        %v947 = vsel %vm945, %v930, %v783
        %v949 = vsel %vm945, %v932, %v785
        %v951 = vsel %vm945, %v934, %v787
        %v953 = vsel %vm945, %v936, %v789
        %v955 = vsel %vm945, %v938, %v791
        %v957 = vsel %vm945, %v940, %v793
        %v959 = vsel %vm945, %v942, %v795
        %v961 = vsel %vm945, %v944, %v797
        %vm962 = vcmask 195584
        %v964 = vsel %vm962, %v947, %v809
        %v966 = vsel %vm962, %v949, %v811
        %v968 = vsel %vm962, %v951, %v813
        %v970 = vsel %vm962, %v953, %v815
        %v972 = vsel %vm962, %v955, %v817
        %v974 = vsel %vm962, %v957, %v819
        %v976 = vsel %vm962, %v959, %v821
        %v978 = vsel %vm962, %v961, %v823
        %vm979 = vcmask 228352
        %v981 = vsel %vm979, %v964, %v828
        %v983 = vsel %vm979, %v966, %v830
        %v985 = vsel %vm979, %v968, %v832
        %v987 = vsel %vm979, %v970, %v834
        %v989 = vsel %vm979, %v972, %v836
        %v991 = vsel %vm979, %v974, %v838
        %v993 = vsel %vm979, %v976, %v840
        %v995 = vsel %vm979, %v978, %v842
        %vm996 = vcmask 261120
        %v998 = vsel %vm996, %v981, %v854
        %v1000 = vsel %vm996, %v983, %v856
        %v1002 = vsel %vm996, %v985, %v858
        %v1004 = vsel %vm996, %v987, %v860
        %v1006 = vsel %vm996, %v989, %v862
        %v1008 = vsel %vm996, %v991, %v864
        %v1010 = vsel %vm996, %v993, %v866
        %v1012 = vsel %vm996, %v995, %v868
        %vm1013 = vcmask 293888
        %v1015 = vsel %vm1013, %v998, 0
        %v1016 = vsel %vm1013, %v1000, 0
        %v1017 = vsel %vm1013, %v1002, 0
        %v1018 = vsel %vm1013, %v1004, 0
        %v1019 = vsel %vm1013, %v1006, 0
        %v1020 = vsel %vm1013, %v1008, 0
        %v1021 = vsel %vm1013, %v1010, 0
        %v1022 = vsel %vm1013, %v1012, 0
        %v1023 = vld [vmem:[%s4] sm:$0xf]
        %v1024 = vld [vmem:[%s4 + $0x4] sm:$0xf]
        %v1025 = vld [vmem:[%s4 + $0x8] sm:$0xf]
        %v1026 = vld [vmem:[%s4 + $0xc] sm:$0xf]
        %v1027 = vld [vmem:[%s4 + $0x10] sm:$0xf]
        %v1028 = vld [vmem:[%s4 + $0x14] sm:$0xf]
        %v1029 = vld [vmem:[%s4 + $0x18] sm:$0xf]
        %v1030 = vld [vmem:[%s4 + $0x1c] sm:$0xf]
        %v1031 = vld [vmem:[%s4 + $0x20] sm:$0xf]
        %v1032 = vld [vmem:[%s4 + $0x24] sm:$0xf]
        %v1033 = vld [vmem:[%s4 + $0x28] sm:$0xf]
        %v1034 = vld [vmem:[%s4 + $0x2c] sm:$0xf]
        %v1035 = vld [vmem:[%s4 + $0x30] sm:$0xf]
        %v1036 = vld [vmem:[%s4 + $0x34] sm:$0xf]
        %v1037 = vld [vmem:[%s4 + $0x38] sm:$0xf]
        %v1038 = vld [vmem:[%s4 + $0x3c] sm:$0xf]
        %v1039 = vld [vmem:[%s5] sm:$0x1]
        %v1041 = vlaneseq
        %v1042 = vshrl.u32 %v1041, 7
        %v1043 = vsub.s32 0, %v1042
        %v1044 = vrot.slane %v1039, %v1043
        %v1054 = vunpack.c.l.b16 %v1015
        %v1055 = vunpack.c.l.b16 %v1016
        %v1056 = vunpack.c.l.b16 %v1017
        %v1057 = vunpack.c.l.b16 %v1018
        %v1058 = vunpack.c.l.b16 %v1019
        %v1059 = vunpack.c.l.b16 %v1020
        %v1060 = vunpack.c.l.b16 %v1021
        %v1061 = vunpack.c.l.b16 %v1022
        %v1062 = vpack.c.b16 %v1055, %v1054
        %v1063 = vpack.c.b16 %v1057, %v1056
        %v1064 = vpack.c.b16 %v1059, %v1058
        %v1065 = vpack.c.b16 %v1061, %v1060
        %v1086 = vunpack.c.l.b16 %v1023
        %v1087 = vunpack.c.l.b16 %v1024
        %v1088 = vunpack.c.l.b16 %v1025
        %v1089 = vunpack.c.l.b16 %v1026
        %v1090 = vunpack.c.l.b16 %v1027
        %v1091 = vunpack.c.l.b16 %v1028
        %v1092 = vunpack.c.l.b16 %v1029
        %v1093 = vunpack.c.l.b16 %v1030
        %v1094 = vunpack.c.l.b16 %v1031
        %v1095 = vunpack.c.l.b16 %v1032
        %v1096 = vunpack.c.l.b16 %v1033
        %v1097 = vunpack.c.l.b16 %v1034
        %v1098 = vunpack.c.l.b16 %v1035
        %v1099 = vunpack.c.l.b16 %v1036
        %v1100 = vunpack.c.l.b16 %v1037
        %v1101 = vunpack.c.l.b16 %v1038
        %v1102 = vpack.c.b16 %v1087, %v1086
        %v1103 = vpack.c.b16 %v1089, %v1088
        %v1104 = vpack.c.b16 %v1091, %v1090
        %v1105 = vpack.c.b16 %v1093, %v1092
        %v1106 = vpack.c.b16 %v1095, %v1094
        %v1107 = vpack.c.b16 %v1097, %v1096
        %v1108 = vpack.c.b16 %v1099, %v1098
        %v1109 = vpack.c.b16 %v1101, %v1100
        %1118 = vmatprep.subr.bf16.mxu0 0
        %1119 = vmatpush1.bf16.msra.mxu0 %v1102
        %1120 = vmatprep.subr.bf16.mxu0 0
        %1121 = vmatpush1.bf16.msra.mxu0 %v1103
        %1122 = vmatprep.subr.bf16.mxu0 0
        %1123 = vmatpush1.bf16.msra.mxu0 %v1104
        %1124 = vmatprep.subr.bf16.mxu0 0
        %1125 = vmatpush1.bf16.msra.mxu0 %v1105
        %1126 = vmatprep.subr.bf16.mxu0 0
        %1127 = vmatpush1.bf16.msra.mxu0 %v1106
        %1128 = vmatprep.subr.bf16.mxu0 0
        %1129 = vmatpush1.bf16.msra.mxu0 %v1107
        %1130 = vmatprep.subr.bf16.mxu0 0
        %1131 = vmatpush1.bf16.msra.mxu0 %v1108
        %1132 = vmatprep.subr.bf16.mxu0 0
        %1133 = vmatpush1.bf16.msra.mxu0 %v1109
        %1134 = vmatprep.subr.bf16.mxu0 0
        %1135 = vmatpush1.bf16.msra.mxu0 0
        %1136 = vmatprep.subr.bf16.mxu0 0
        %1137 = vmatpush1.bf16.msra.mxu0 0
        %1138 = vmatprep.subr.bf16.mxu0 0
        %1139 = vmatpush1.bf16.msra.mxu0 0
        %1140 = vmatprep.subr.bf16.mxu0 0
        %1141 = vmatpush1.bf16.msra.mxu0 0
        %1142 = vmatprep.subr.bf16.mxu0 0
        %1143 = vmatpush1.bf16.msra.mxu0 0
        %1144 = vmatprep.subr.bf16.mxu0 0
        %1145 = vmatpush1.bf16.msra.mxu0 0
        %1146 = vmatprep.subr.bf16.mxu0 0
        %1147 = vmatpush1.bf16.msra.mxu0 0
        %1148 = vmatprep.subr.bf16.mxu0 0
        %1149 = vmatpush1.bf16.msra.mxu0 0
        %1150 = vmatprep.mubr.bf16.mxu0 0
        %1151 = vmatmul.mubr.bf16.gmra.mrb[0].mxu0 %v1062
        %v1152 = vpop.f32.mrb[0].mxu0
        %v1153 = vadd.f32 %v1044, %v1152
        %v1154 = vpop.f32.mrb[0].mxu0
        %v1155 = vpop.f32.mrb[0].mxu0
        %v1156 = vadd.f32 %v1044, %v1155
        %v1157 = vpop.f32.mrb[0].mxu0
        %1158 = vmatprep.mubr.bf16.mxu0 0
        %1159 = vmatmul.mubr.bf16.gmra.mrb[0].mxu0 %v1063
        %v1160 = vpop.f32.mrb[0].mxu0
        %v1161 = vadd.f32 %v1044, %v1160
        %v1162 = vpop.f32.mrb[0].mxu0
        %v1163 = vpop.f32.mrb[0].mxu0
        %v1164 = vadd.f32 %v1044, %v1163
        %v1165 = vpop.f32.mrb[0].mxu0
        %1166 = vmatprep.mubr.bf16.mxu0 0
        %1167 = vmatmul.mubr.bf16.gmra.mrb[0].mxu0 %v1064
        %v1168 = vpop.f32.mrb[0].mxu0
        %v1169 = vadd.f32 %v1044, %v1168
        %v1170 = vpop.f32.mrb[0].mxu0
        %v1171 = vpop.f32.mrb[0].mxu0
        %v1172 = vadd.f32 %v1044, %v1171
        %v1173 = vpop.f32.mrb[0].mxu0
        %1174 = vmatprep.mubr.bf16.mxu0 0
        %1175 = vmatmul.mubr.bf16.gmra.mrb[0].mxu0 %v1065
        %v1176 = vpop.f32.mrb[0].mxu0
        %v1177 = vadd.f32 %v1044, %v1176
        %v1178 = vpop.f32.mrb[0].mxu0
        %v1179 = vpop.f32.mrb[0].mxu0
        %v1180 = vadd.f32 %v1044, %v1179
        %v1181 = vpop.f32.mrb[0].mxu0
        %1182 = vdwg.mxu0
        %v1183 = vmax.f32 %v1153, 0.0
        %v1184 = vmax.f32 %v1156, 0.0
        %v1185 = vmax.f32 %v1161, 0.0
        %v1186 = vmax.f32 %v1164, 0.0
        %v1187 = vmax.f32 %v1169, 0.0
        %v1188 = vmax.f32 %v1172, 0.0
        %v1189 = vmax.f32 %v1177, 0.0
        %v1190 = vmax.f32 %v1180, 0.0
        %1191 = vst.msk [vmem:[#allocation2] sm:$0xff] %vm894, 0.0
        %vm1192 = vcmask 58368
        %1193 = vst.msk [vmem:[#allocation2 + $0x8] sm:$0x3] %vm1192, 0.0
        %1194 = vst.msk [vmem:[#allocation2 + $0x10] sm:$0xff] %vm894, 0.0
        %1195 = vst.msk [vmem:[#allocation2 + $0x18] sm:$0x3] %vm1192, 0.0
        %1196 = vst.msk [vmem:[#allocation2 + $0x20] sm:$0xff] %vm894, 0.0
        %1197 = vst.msk [vmem:[#allocation2 + $0x28] sm:$0x3] %vm1192, 0.0
        %1198 = vst.msk [vmem:[#allocation2 + $0x30] sm:$0xff] %vm894, 0.0
        %1199 = vst.msk [vmem:[#allocation2 + $0x38] sm:$0x3] %vm1192, 0.0
        %1200 = vst.msk [vmem:[#allocation2 + $0x40] sm:$0xff] %vm894, 0.0
        %1201 = vst.msk [vmem:[#allocation2 + $0x48] sm:$0x3] %vm1192, 0.0
        %1202 = vst.msk [vmem:[#allocation2 + $0x50] sm:$0xff] %vm894, 0.0
        %1203 = vst.msk [vmem:[#allocation2 + $0x58] sm:$0x3] %vm1192, 0.0
        %1204 = vst.msk [vmem:[#allocation2 + $0x60] sm:$0xff] %vm894, 0.0
        %1205 = vst.msk [vmem:[#allocation2 + $0x68] sm:$0x3] %vm1192, 0.0
        %1206 = vst.msk [vmem:[#allocation2 + $0x70] sm:$0xff] %vm894, 0.0
        %1207 = vst.msk [vmem:[#allocation2 + $0x78] sm:$0x3] %vm1192, 0.0
        %1208 = vst.msk [vmem:[#allocation2 + $0x80] sm:$0xff] %vm894, 0.0
        %1209 = vst.msk [vmem:[#allocation2 + $0x88] sm:$0x3] %vm1192, 0.0
        %1210 = vst.msk [vmem:[#allocation2 + $0x90] sm:$0xff] %vm894, 0.0
        %1211 = vst.msk [vmem:[#allocation2 + $0x98] sm:$0x3] %vm1192, 0.0
        %s1212 = scalar_lea.vmem [#allocation2], 16
        %1213 = vst.msk [vmem:[%s1212 + $0x1] sm:$0xff] %vm894, %v1183
        %1214 = vst.msk [vmem:[%s1212 + $0x11] sm:$0xff] %vm894, %v1184
        %1215 = vst.msk [vmem:[%s1212 + $0x21] sm:$0xff] %vm894, %v1185
        %1216 = vst.msk [vmem:[%s1212 + $0x31] sm:$0xff] %vm894, %v1186
        %1217 = vst.msk [vmem:[%s1212 + $0x41] sm:$0xff] %vm894, %v1187
        %1218 = vst.msk [vmem:[%s1212 + $0x51] sm:$0xff] %vm894, %v1188
        %1219 = vst.msk [vmem:[%s1212 + $0x61] sm:$0xff] %vm894, %v1189
        %1220 = vst.msk [vmem:[%s1212 + $0x71] sm:$0xff] %vm894, %v1190
        %v1221 = vld [vmem:[#allocation2] sm:$0xff]
        %v1222 = vld [vmem:[#allocation2 + $0x8] sm:$0x3]
        %v1223 = vld [vmem:[#allocation2 + $0x10] sm:$0xff]
        %v1224 = vld [vmem:[#allocation2 + $0x18] sm:$0x3]
        %v1225 = vld [vmem:[#allocation2 + $0x20] sm:$0xff]
        %v1226 = vld [vmem:[#allocation2 + $0x28] sm:$0x3]
        %v1227 = vld [vmem:[#allocation2 + $0x30] sm:$0xff]
        %v1228 = vld [vmem:[#allocation2 + $0x38] sm:$0x3]
        %v1229 = vld [vmem:[#allocation2 + $0x40] sm:$0xff]
        %v1230 = vld [vmem:[#allocation2 + $0x48] sm:$0x3]
        %v1231 = vld [vmem:[#allocation2 + $0x50] sm:$0xff]
        %v1232 = vld [vmem:[#allocation2 + $0x58] sm:$0x3]
        %v1233 = vld [vmem:[#allocation2 + $0x60] sm:$0xff]
        %v1234 = vld [vmem:[#allocation2 + $0x68] sm:$0x3]
        %v1235 = vld [vmem:[#allocation2 + $0x70] sm:$0xff]
        %v1236 = vld [vmem:[#allocation2 + $0x78] sm:$0x3]
        %v1237 = vld [vmem:[#allocation2 + $0x80] sm:$0xff]
        %v1238 = vld [vmem:[#allocation2 + $0x88] sm:$0x3]
        %v1239 = vld [vmem:[#allocation2 + $0x90] sm:$0xff]
        %v1240 = vld [vmem:[#allocation2 + $0x98] sm:$0x3]
        %vm1257 = vcmask 1046528
        %v1258 = vrot.slane %v1221, 1
        %v1259 = vrot.slane %v1222, 1
        %v1260 = vsel %vm1257, %v1258, %v1259
        %v1261 = vrot.slane %v1223, 1
        %v1262 = vrot.slane %v1224, 1
        %v1263 = vsel %vm1257, %v1261, %v1262
        %v1264 = vrot.slane %v1225, 1
        %v1265 = vrot.slane %v1226, 1
        %v1266 = vsel %vm1257, %v1264, %v1265
        %v1267 = vrot.slane %v1227, 1
        %v1268 = vrot.slane %v1228, 1
        %v1269 = vsel %vm1257, %v1267, %v1268
        %v1270 = vrot.slane %v1229, 1
        %v1271 = vrot.slane %v1230, 1
        %v1272 = vsel %vm1257, %v1270, %v1271
        %v1273 = vrot.slane %v1231, 1
        %v1274 = vrot.slane %v1232, 1
        %v1275 = vsel %vm1257, %v1273, %v1274
        %v1276 = vrot.slane %v1233, 1
        %v1277 = vrot.slane %v1234, 1
        %v1278 = vsel %vm1257, %v1276, %v1277
        %v1279 = vrot.slane %v1235, 1
        %v1280 = vrot.slane %v1236, 1
        %v1281 = vsel %vm1257, %v1279, %v1280
        %1282 = vrot.lane.b32.xlu0 %v1260, 8
        %v1283 = vpop.permute.xlu0 %1282
        %1284 = vrot.lane.b32.xlu0 %v1263, 8
        %v1285 = vpop.permute.xlu0 %1284
        %1286 = vrot.lane.b32.xlu0 %v1266, 8
        %v1287 = vpop.permute.xlu0 %1286
        %1288 = vrot.lane.b32.xlu0 %v1269, 8
        %v1289 = vpop.permute.xlu0 %1288
        %1290 = vrot.lane.b32.xlu0 %v1272, 8
        %v1291 = vpop.permute.xlu0 %1290
        %1292 = vrot.lane.b32.xlu0 %v1275, 8
        %v1293 = vpop.permute.xlu0 %1292
        %1294 = vrot.lane.b32.xlu0 %v1278, 8
        %v1295 = vpop.permute.xlu0 %1294
        %1296 = vrot.lane.b32.xlu0 %v1281, 8
        %v1297 = vpop.permute.xlu0 %1296
        %vm1306 = vcmask 1045504
        %v1307 = vrot.slane %v1221, 2
        %v1308 = vrot.slane %v1222, 2
        %v1309 = vsel %vm1306, %v1307, %v1308
        %v1310 = vrot.slane %v1223, 2
        %v1311 = vrot.slane %v1224, 2
        %v1312 = vsel %vm1306, %v1310, %v1311
        %v1313 = vrot.slane %v1225, 2
        %v1314 = vrot.slane %v1226, 2
        %v1315 = vsel %vm1306, %v1313, %v1314
        %v1316 = vrot.slane %v1227, 2
        %v1317 = vrot.slane %v1228, 2
        %v1318 = vsel %vm1306, %v1316, %v1317
        %v1319 = vrot.slane %v1229, 2
        %v1320 = vrot.slane %v1230, 2
        %v1321 = vsel %vm1306, %v1319, %v1320
        %v1322 = vrot.slane %v1231, 2
        %v1323 = vrot.slane %v1232, 2
        %v1324 = vsel %vm1306, %v1322, %v1323
        %v1325 = vrot.slane %v1233, 2
        %v1326 = vrot.slane %v1234, 2
        %v1327 = vsel %vm1306, %v1325, %v1326
        %v1328 = vrot.slane %v1235, 2
        %v1329 = vrot.slane %v1236, 2
        %v1330 = vsel %vm1306, %v1328, %v1329
        %1331 = vrot.lane.b32.xlu0 %v1309, 16
        %v1332 = vpop.permute.xlu0 %1331
        %1333 = vrot.lane.b32.xlu0 %v1312, 16
        %v1334 = vpop.permute.xlu0 %1333
        %1335 = vrot.lane.b32.xlu0 %v1315, 16
        %v1336 = vpop.permute.xlu0 %1335
        %1337 = vrot.lane.b32.xlu0 %v1318, 16
        %v1338 = vpop.permute.xlu0 %1337
        %1339 = vrot.lane.b32.xlu0 %v1321, 16
        %v1340 = vpop.permute.xlu0 %1339
        %1341 = vrot.lane.b32.xlu0 %v1324, 16
        %v1342 = vpop.permute.xlu0 %1341
        %1343 = vrot.lane.b32.xlu0 %v1327, 16
        %v1344 = vpop.permute.xlu0 %1343
        %1345 = vrot.lane.b32.xlu0 %v1330, 16
        %v1346 = vpop.permute.xlu0 %1345
        %1356 = vrot.lane.b32.xlu0 %v1223, 24
        %v1357 = vpop.permute.xlu0 %1356
        %1358 = vrot.lane.b32.xlu0 %v1225, 24
        %v1359 = vpop.permute.xlu0 %1358
        %1360 = vrot.lane.b32.xlu0 %v1227, 24
        %v1361 = vpop.permute.xlu0 %1360
        %1362 = vrot.lane.b32.xlu0 %v1229, 24
        %v1363 = vpop.permute.xlu0 %1362
        %1364 = vrot.lane.b32.xlu0 %v1231, 24
        %v1365 = vpop.permute.xlu0 %1364
        %1366 = vrot.lane.b32.xlu0 %v1233, 24
        %v1367 = vpop.permute.xlu0 %1366
        %1368 = vrot.lane.b32.xlu0 %v1235, 24
        %v1369 = vpop.permute.xlu0 %1368
        %1370 = vrot.lane.b32.xlu0 %v1237, 24
        %v1371 = vpop.permute.xlu0 %1370
        %v1381 = vrot.slane %v1237, 1
        %v1382 = vrot.slane %v1238, 1
        %v1383 = vsel %vm1257, %v1381, %v1382
        %1384 = vrot.lane.b32.xlu0 %v1263, 32
        %v1385 = vpop.permute.xlu0 %1384
        %1386 = vrot.lane.b32.xlu0 %v1266, 32
        %v1387 = vpop.permute.xlu0 %1386
        %1388 = vrot.lane.b32.xlu0 %v1269, 32
        %v1389 = vpop.permute.xlu0 %1388
        %1390 = vrot.lane.b32.xlu0 %v1272, 32
        %v1391 = vpop.permute.xlu0 %1390
        %1392 = vrot.lane.b32.xlu0 %v1275, 32
        %v1393 = vpop.permute.xlu0 %1392
        %1394 = vrot.lane.b32.xlu0 %v1278, 32
        %v1395 = vpop.permute.xlu0 %1394
        %1396 = vrot.lane.b32.xlu0 %v1281, 32
        %v1397 = vpop.permute.xlu0 %1396
        %1398 = vrot.lane.b32.xlu0 %v1383, 32
        %v1399 = vpop.permute.xlu0 %1398
        %v1408 = vrot.slane %v1237, 2
        %v1409 = vrot.slane %v1238, 2
        %v1410 = vsel %vm1306, %v1408, %v1409
        %1411 = vrot.lane.b32.xlu0 %v1312, 40
        %v1412 = vpop.permute.xlu0 %1411
        %1413 = vrot.lane.b32.xlu0 %v1315, 40
        %v1414 = vpop.permute.xlu0 %1413
        %1415 = vrot.lane.b32.xlu0 %v1318, 40
        %v1416 = vpop.permute.xlu0 %1415
        %1417 = vrot.lane.b32.xlu0 %v1321, 40
        %v1418 = vpop.permute.xlu0 %1417
        %1419 = vrot.lane.b32.xlu0 %v1324, 40
        %v1420 = vpop.permute.xlu0 %1419
        %1421 = vrot.lane.b32.xlu0 %v1327, 40
        %v1422 = vpop.permute.xlu0 %1421
        %1423 = vrot.lane.b32.xlu0 %v1330, 40
        %v1424 = vpop.permute.xlu0 %1423
        %1425 = vrot.lane.b32.xlu0 %v1410, 40
        %v1426 = vpop.permute.xlu0 %1425
        %1436 = vrot.lane.b32.xlu0 %v1225, 48
        %v1437 = vpop.permute.xlu0 %1436
        %1438 = vrot.lane.b32.xlu0 %v1227, 48
        %v1439 = vpop.permute.xlu0 %1438
        %1440 = vrot.lane.b32.xlu0 %v1229, 48
        %v1441 = vpop.permute.xlu0 %1440
        %1442 = vrot.lane.b32.xlu0 %v1231, 48
        %v1443 = vpop.permute.xlu0 %1442
        %1444 = vrot.lane.b32.xlu0 %v1233, 48
        %v1445 = vpop.permute.xlu0 %1444
        %1446 = vrot.lane.b32.xlu0 %v1235, 48
        %v1447 = vpop.permute.xlu0 %1446
        %1448 = vrot.lane.b32.xlu0 %v1237, 48
        %v1449 = vpop.permute.xlu0 %1448
        %1450 = vrot.lane.b32.xlu0 %v1239, 48
        %v1451 = vpop.permute.xlu0 %1450
        %v1461 = vrot.slane %v1239, 1
        %v1462 = vrot.slane %v1240, 1
        %v1463 = vsel %vm1257, %v1461, %v1462
        %1464 = vrot.lane.b32.xlu0 %v1266, 56
        %v1465 = vpop.permute.xlu0 %1464
        %1466 = vrot.lane.b32.xlu0 %v1269, 56
        %v1467 = vpop.permute.xlu0 %1466
        %1468 = vrot.lane.b32.xlu0 %v1272, 56
        %v1469 = vpop.permute.xlu0 %1468
        %1470 = vrot.lane.b32.xlu0 %v1275, 56
        %v1471 = vpop.permute.xlu0 %1470
        %1472 = vrot.lane.b32.xlu0 %v1278, 56
        %v1473 = vpop.permute.xlu0 %1472
        %1474 = vrot.lane.b32.xlu0 %v1281, 56
        %v1475 = vpop.permute.xlu0 %1474
        %1476 = vrot.lane.b32.xlu0 %v1383, 56
        %v1477 = vpop.permute.xlu0 %1476
        %1478 = vrot.lane.b32.xlu0 %v1463, 56
        %v1479 = vpop.permute.xlu0 %1478
        %v1488 = vrot.slane %v1239, 2
        %v1489 = vrot.slane %v1240, 2
        %v1490 = vsel %vm1306, %v1488, %v1489
        %1491 = vrot.lane.b32.xlu0 %v1315, 64
        %v1492 = vpop.permute.xlu0 %1491
        %1493 = vrot.lane.b32.xlu0 %v1318, 64
        %v1494 = vpop.permute.xlu0 %1493
        %1495 = vrot.lane.b32.xlu0 %v1321, 64
        %v1496 = vpop.permute.xlu0 %1495
        %1497 = vrot.lane.b32.xlu0 %v1324, 64
        %v1498 = vpop.permute.xlu0 %1497
        %1499 = vrot.lane.b32.xlu0 %v1327, 64
        %v1500 = vpop.permute.xlu0 %1499
        %1501 = vrot.lane.b32.xlu0 %v1330, 64
        %v1502 = vpop.permute.xlu0 %1501
        %1503 = vrot.lane.b32.xlu0 %v1410, 64
        %v1504 = vpop.permute.xlu0 %1503
        %1505 = vrot.lane.b32.xlu0 %v1490, 64
        %v1506 = vpop.permute.xlu0 %1505
        %v1515 = vsel %vm894, %v1221, %v1283
        %v1516 = vsel %vm894, %v1223, %v1285
        %v1517 = vsel %vm894, %v1225, %v1287
        %v1518 = vsel %vm894, %v1227, %v1289
        %v1519 = vsel %vm894, %v1229, %v1291
        %v1520 = vsel %vm894, %v1231, %v1293
        %v1521 = vsel %vm894, %v1233, %v1295
        %v1522 = vsel %vm894, %v1235, %v1297
        %v1523 = vsel %vm928, %v1515, %v1332
        %v1524 = vsel %vm928, %v1516, %v1334
        %v1525 = vsel %vm928, %v1517, %v1336
        %v1526 = vsel %vm928, %v1518, %v1338
        %v1527 = vsel %vm928, %v1519, %v1340
        %v1528 = vsel %vm928, %v1520, %v1342
        %v1529 = vsel %vm928, %v1521, %v1344
        %v1530 = vsel %vm928, %v1522, %v1346
        %v1531 = vsel %vm962, %v1523, %v1357
        %v1532 = vsel %vm962, %v1524, %v1359
        %v1533 = vsel %vm962, %v1525, %v1361
        %v1534 = vsel %vm962, %v1526, %v1363
        %v1535 = vsel %vm962, %v1527, %v1365
        %v1536 = vsel %vm962, %v1528, %v1367
        %v1537 = vsel %vm962, %v1529, %v1369
        %v1538 = vsel %vm962, %v1530, %v1371
        %v1539 = vsel %vm996, %v1531, %v1385
        %v1540 = vsel %vm996, %v1532, %v1387
        %v1541 = vsel %vm996, %v1533, %v1389
        %v1542 = vsel %vm996, %v1534, %v1391
        %v1543 = vsel %vm996, %v1535, %v1393
        %v1544 = vsel %vm996, %v1536, %v1395
        %v1545 = vsel %vm996, %v1537, %v1397
        %v1546 = vsel %vm996, %v1538, %v1399
        %vm1547 = vcmask 326656
        %v1548 = vsel %vm1547, %v1539, %v1412
        %v1549 = vsel %vm1547, %v1540, %v1414
        %v1550 = vsel %vm1547, %v1541, %v1416
        %v1551 = vsel %vm1547, %v1542, %v1418
        %v1552 = vsel %vm1547, %v1543, %v1420
        %v1553 = vsel %vm1547, %v1544, %v1422
        %v1554 = vsel %vm1547, %v1545, %v1424
        %v1555 = vsel %vm1547, %v1546, %v1426
        %vm1556 = vcmask 392192
        %v1557 = vsel %vm1556, %v1548, %v1437
        %v1558 = vsel %vm1556, %v1549, %v1439
        %v1559 = vsel %vm1556, %v1550, %v1441
        %v1560 = vsel %vm1556, %v1551, %v1443
        %v1561 = vsel %vm1556, %v1552, %v1445
        %v1562 = vsel %vm1556, %v1553, %v1447
        %v1563 = vsel %vm1556, %v1554, %v1449
        %v1564 = vsel %vm1556, %v1555, %v1451
        %vm1565 = vcmask 457728
        %v1566 = vsel %vm1565, %v1557, %v1465
        %v1567 = vsel %vm1565, %v1558, %v1467
        %v1568 = vsel %vm1565, %v1559, %v1469
        %v1569 = vsel %vm1565, %v1560, %v1471
        %v1570 = vsel %vm1565, %v1561, %v1473
        %v1571 = vsel %vm1565, %v1562, %v1475
        %v1572 = vsel %vm1565, %v1563, %v1477
        %v1573 = vsel %vm1565, %v1564, %v1479
        %vm1574 = vcmask 523264
        %v1575 = vsel %vm1574, %v1566, %v1492
        %v1576 = vsel %vm1574, %v1567, %v1494
        %v1577 = vsel %vm1574, %v1568, %v1496
        %v1578 = vsel %vm1574, %v1569, %v1498
        %v1579 = vsel %vm1574, %v1570, %v1500
        %v1580 = vsel %vm1574, %v1571, %v1502
        %v1581 = vsel %vm1574, %v1572, %v1504
        %v1582 = vsel %vm1574, %v1573, %v1506
        %vm1583 = vcmask 588800
        %v1584 = vsel %vm1583, %v1575, 0.0
        %v1585 = vsel %vm1583, %v1576, 0.0
        %v1586 = vsel %vm1583, %v1577, 0.0
        %v1587 = vsel %vm1583, %v1578, 0.0
        %v1588 = vsel %vm1583, %v1579, 0.0
        %v1589 = vsel %vm1583, %v1580, 0.0
        %v1590 = vsel %vm1583, %v1581, 0.0
        %v1591 = vsel %vm1583, %v1582, 0.0
        %v1592 = vpack.c.bf16 %v1585, %v1584
        %v1593 = vpack.c.bf16 %v1587, %v1586
        %v1594 = vpack.c.bf16 %v1589, %v1588
        %v1595 = vpack.c.bf16 %v1591, %v1590
        %v1596 = vld [vmem:[%s6] sm:$0xf]
        %v1597 = vld [vmem:[%s6 + $0x4] sm:$0xf]
        %v1598 = vld [vmem:[%s6 + $0x8] sm:$0xf]
        %v1599 = vld [vmem:[%s6 + $0xc] sm:$0xf]
        %v1600 = vld [vmem:[%s6 + $0x10] sm:$0xf]
        %v1601 = vld [vmem:[%s6 + $0x14] sm:$0xf]
        %v1602 = vld [vmem:[%s6 + $0x18] sm:$0xf]
        %v1603 = vld [vmem:[%s6 + $0x1c] sm:$0xf]
        %v1604 = vld [vmem:[%s6 + $0x20] sm:$0xf]
        %v1605 = vld [vmem:[%s6 + $0x24] sm:$0xf]
        %v1606 = vld [vmem:[%s6 + $0x28] sm:$0xf]
        %v1607 = vld [vmem:[%s6 + $0x2c] sm:$0xf]
        %v1608 = vld [vmem:[%s6 + $0x30] sm:$0xf]
        %v1609 = vld [vmem:[%s6 + $0x34] sm:$0xf]
        %v1610 = vld [vmem:[%s6 + $0x38] sm:$0xf]
        %v1611 = vld [vmem:[%s6 + $0x3c] sm:$0xf]
        %v1612 = vld [vmem:[%s7] sm:$0x1]
        %v1614 = vlaneseq
        %v1615 = vshrl.u32 %v1614, 7
        %v1616 = vsub.s32 0, %v1615
        %v1617 = vrot.slane %v1612, %v1616
        %v1635 = vunpack.c.l.b16 %v1596
        %v1636 = vunpack.c.l.b16 %v1597
        %v1637 = vunpack.c.l.b16 %v1598
        %v1638 = vunpack.c.l.b16 %v1599
        %v1639 = vunpack.c.l.b16 %v1600
        %v1640 = vunpack.c.l.b16 %v1601
        %v1641 = vunpack.c.l.b16 %v1602
        %v1642 = vunpack.c.l.b16 %v1603
        %v1643 = vunpack.c.l.b16 %v1604
        %v1644 = vunpack.c.l.b16 %v1605
        %v1645 = vunpack.c.l.b16 %v1606
        %v1646 = vunpack.c.l.b16 %v1607
        %v1647 = vunpack.c.l.b16 %v1608
        %v1648 = vunpack.c.l.b16 %v1609
        %v1649 = vunpack.c.l.b16 %v1610
        %v1650 = vunpack.c.l.b16 %v1611
        %v1651 = vpack.c.b16 %v1636, %v1635
        %v1652 = vpack.c.b16 %v1638, %v1637
        %v1653 = vpack.c.b16 %v1640, %v1639
        %v1654 = vpack.c.b16 %v1642, %v1641
        %v1655 = vpack.c.b16 %v1644, %v1643
        %v1656 = vpack.c.b16 %v1646, %v1645
        %v1657 = vpack.c.b16 %v1648, %v1647
        %v1658 = vpack.c.b16 %v1650, %v1649
        %1667 = vmatprep.subr.bf16.mxu0 0
        %1668 = vmatpush1.bf16.msra.mxu0 %v1651
        %1669 = vmatprep.subr.bf16.mxu0 0
        %1670 = vmatpush1.bf16.msra.mxu0 %v1652
        %1671 = vmatprep.subr.bf16.mxu0 0
        %1672 = vmatpush1.bf16.msra.mxu0 %v1653
        %1673 = vmatprep.subr.bf16.mxu0 0
        %1674 = vmatpush1.bf16.msra.mxu0 %v1654
        %1675 = vmatprep.subr.bf16.mxu0 0
        %1676 = vmatpush1.bf16.msra.mxu0 %v1655
        %1677 = vmatprep.subr.bf16.mxu0 0
        %1678 = vmatpush1.bf16.msra.mxu0 %v1656
        %1679 = vmatprep.subr.bf16.mxu0 0
        %1680 = vmatpush1.bf16.msra.mxu0 %v1657
        %1681 = vmatprep.subr.bf16.mxu0 0
        %1682 = vmatpush1.bf16.msra.mxu0 %v1658
        %1683 = vmatprep.subr.bf16.mxu0 0
        %1684 = vmatpush1.bf16.msra.mxu0 0
        %1685 = vmatprep.subr.bf16.mxu0 0
        %1686 = vmatpush1.bf16.msra.mxu0 0
        %1687 = vmatprep.subr.bf16.mxu0 0
        %1688 = vmatpush1.bf16.msra.mxu0 0
        %1689 = vmatprep.subr.bf16.mxu0 0
        %1690 = vmatpush1.bf16.msra.mxu0 0
        %1691 = vmatprep.subr.bf16.mxu0 0
        %1692 = vmatpush1.bf16.msra.mxu0 0
        %1693 = vmatprep.subr.bf16.mxu0 0
        %1694 = vmatpush1.bf16.msra.mxu0 0
        %1695 = vmatprep.subr.bf16.mxu0 0
        %1696 = vmatpush1.bf16.msra.mxu0 0
        %1697 = vmatprep.subr.bf16.mxu0 0
        %1698 = vmatpush1.bf16.msra.mxu0 0
        %1699 = vmatprep.mubr.bf16.mxu0 0
        %1700 = vmatmul.mubr.bf16.gmra.mrb[0].mxu0 %v1592
        %v1701 = vpop.f32.mrb[0].mxu0
        %v1702 = vadd.f32 %v1617, %v1701
        %v1703 = vpop.f32.mrb[0].mxu0
        %v1704 = vpop.f32.mrb[0].mxu0
        %v1705 = vadd.f32 %v1617, %v1704
        %v1706 = vpop.f32.mrb[0].mxu0
        %1707 = vmatprep.mubr.bf16.mxu0 0
        %1708 = vmatmul.mubr.bf16.gmra.mrb[0].mxu0 %v1593
        %v1709 = vpop.f32.mrb[0].mxu0
        %v1710 = vadd.f32 %v1617, %v1709
        %v1711 = vpop.f32.mrb[0].mxu0
        %v1712 = vpop.f32.mrb[0].mxu0
        %v1713 = vadd.f32 %v1617, %v1712
        %v1714 = vpop.f32.mrb[0].mxu0
        %1715 = vmatprep.mubr.bf16.mxu0 0
        %1716 = vmatmul.mubr.bf16.gmra.mrb[0].mxu0 %v1594
        %v1717 = vpop.f32.mrb[0].mxu0
        %v1718 = vadd.f32 %v1617, %v1717
        %v1719 = vpop.f32.mrb[0].mxu0
        %v1720 = vpop.f32.mrb[0].mxu0
        %v1721 = vadd.f32 %v1617, %v1720
        %v1722 = vpop.f32.mrb[0].mxu0
        %1723 = vmatprep.mubr.bf16.mxu0 0
        %1724 = vmatmul.mubr.bf16.gmra.mrb[0].mxu0 %v1595
        %v1725 = vpop.f32.mrb[0].mxu0
        %v1726 = vadd.f32 %v1617, %v1725
        %v1727 = vpop.f32.mrb[0].mxu0
        %v1728 = vpop.f32.mrb[0].mxu0
        %v1729 = vadd.f32 %v1617, %v1728
        %v1730 = vpop.f32.mrb[0].mxu0
        %1731 = vdwg.mxu0
        %v1732 = vld [vmem:[%s8] sm:$0x3]
        %v1733 = vld [vmem:[%s9] sm:$0x1]
        %v1735 = vlaneseq
        %v1736 = vshrl.u32 %v1735, 7
        %v1737 = vsub.s32 0, %v1736
        %v1738 = vrot.slane %v1733, %v1737
        %v1740 = vpack.c.b16 %v671, %v670
        %v1741 = vpack.c.b16 %v673, %v672
        %v1742 = vpack.c.b16 %v675, %v674
        %v1743 = vpack.c.b16 %v677, %v676
        %v1745 = vsel %vm869, %v1740, 0
        %v1748 = vsel %vm869, %v1741, 0
        %v1751 = vsel %vm869, %v1742, 0
        %v1754 = vsel %vm869, %v1743, 0
        %vm1756 = vcmask 1041408
        %v1758 = vsel %vm1756, %v1732, 0
        %1760 = vmatprep.subr.bf16.mxu0 0
        %1761 = vmatpush1.bf16.msra.mxu0 %v1758
        %1762 = vmatprep.subr.bf16.mxu0 0
        %1763 = vmatpush1.bf16.msra.mxu0 0
        %1764 = vmatprep.subr.bf16.mxu0 0
        %1765 = vmatpush1.bf16.msra.mxu0 0
        %1766 = vmatprep.subr.bf16.mxu0 0
        %1767 = vmatpush1.bf16.msra.mxu0 0
        %1768 = vmatprep.subr.bf16.mxu0 0
        %1769 = vmatpush1.bf16.msra.mxu0 0
        %1770 = vmatprep.subr.bf16.mxu0 0
        %1771 = vmatpush1.bf16.msra.mxu0 0
        %1772 = vmatprep.subr.bf16.mxu0 0
        %1773 = vmatpush1.bf16.msra.mxu0 0
        %1774 = vmatprep.subr.bf16.mxu0 0
        %1775 = vmatpush1.bf16.msra.mxu0 0
        %1776 = vmatprep.subr.bf16.mxu0 0
        %1777 = vmatpush1.bf16.msra.mxu0 0
        %1778 = vmatprep.subr.bf16.mxu0 0
        %1779 = vmatpush1.bf16.msra.mxu0 0
        %1780 = vmatprep.subr.bf16.mxu0 0
        %1781 = vmatpush1.bf16.msra.mxu0 0
        %1782 = vmatprep.subr.bf16.mxu0 0
        %1783 = vmatpush1.bf16.msra.mxu0 0
        %1784 = vmatprep.subr.bf16.mxu0 0
        %1785 = vmatpush1.bf16.msra.mxu0 0
        %1786 = vmatprep.subr.bf16.mxu0 0
        %1787 = vmatpush1.bf16.msra.mxu0 0
        %1788 = vmatprep.subr.bf16.mxu0 0
        %1789 = vmatpush1.bf16.msra.mxu0 0
        %1790 = vmatprep.subr.bf16.mxu0 0
        %1791 = vmatpush1.bf16.msra.mxu0 0
        %1792 = vmatprep.mubr.bf16.mxu0 0
        %1793 = vmatmul.mubr.bf16.gmra.mrb[0].mxu0 %v1745
        %v1794 = vpop.f32.mrb[0].mxu0
        %v1795 = vadd.f32 %v1738, %v1794
        %v1796 = vpop.f32.mrb[0].mxu0
        %v1797 = vpop.f32.mrb[0].mxu0
        %v1798 = vadd.f32 %v1738, %v1797
        %v1799 = vpop.f32.mrb[0].mxu0
        %1800 = vmatprep.mubr.bf16.mxu0 0
        %1801 = vmatmul.mubr.bf16.gmra.mrb[0].mxu0 %v1748
        %v1802 = vpop.f32.mrb[0].mxu0
        %v1803 = vadd.f32 %v1738, %v1802
        %v1804 = vpop.f32.mrb[0].mxu0
        %v1805 = vpop.f32.mrb[0].mxu0
        %v1806 = vadd.f32 %v1738, %v1805
        %v1807 = vpop.f32.mrb[0].mxu0
        %1808 = vmatprep.mubr.bf16.mxu0 0
        %1809 = vmatmul.mubr.bf16.gmra.mrb[0].mxu0 %v1751
        %v1810 = vpop.f32.mrb[0].mxu0
        %v1811 = vadd.f32 %v1738, %v1810
        %v1812 = vpop.f32.mrb[0].mxu0
        %v1813 = vpop.f32.mrb[0].mxu0
        %v1814 = vadd.f32 %v1738, %v1813
        %v1815 = vpop.f32.mrb[0].mxu0
        %1816 = vmatprep.mubr.bf16.mxu0 0
        %1817 = vmatmul.mubr.bf16.gmra.mrb[0].mxu0 %v1754
        %v1818 = vpop.f32.mrb[0].mxu0
        %v1819 = vadd.f32 %v1738, %v1818
        %v1820 = vpop.f32.mrb[0].mxu0
        %v1821 = vpop.f32.mrb[0].mxu0
        %v1822 = vadd.f32 %v1738, %v1821
        %v1823 = vpop.f32.mrb[0].mxu0
        %1824 = vdwg.mxu0
        %v1825 = vadd.f32 %v1702, %v1795
        %v1826 = vadd.f32 %v1705, %v1798
        %v1827 = vadd.f32 %v1710, %v1803
        %v1828 = vadd.f32 %v1713, %v1806
        %v1829 = vadd.f32 %v1718, %v1811
        %v1830 = vadd.f32 %v1721, %v1814
        %v1831 = vadd.f32 %v1726, %v1819
        %v1832 = vadd.f32 %v1729, %v1822
        %v1833 = vmax.f32 %v1825, 0.0
        %v1834 = vmax.f32 %v1826, 0.0
        %v1835 = vmax.f32 %v1827, 0.0
        %v1836 = vmax.f32 %v1828, 0.0
        %v1837 = vmax.f32 %v1829, 0.0
        %v1838 = vmax.f32 %v1830, 0.0
        %v1839 = vmax.f32 %v1831, 0.0
        %v1840 = vmax.f32 %v1832, 0.0
        %1841 = vst.msk [vmem:[%s397] sm:$0xff] %vm894, %v1833
        %1842 = vst.msk [vmem:[%s397 + $0x8] sm:$0xff] %vm894, %v1834
        %1843 = vst.msk [vmem:[%s397 + $0x10] sm:$0xff] %vm894, %v1835
        %1844 = vst.msk [vmem:[%s397 + $0x18] sm:$0xff] %vm894, %v1836
        %1845 = vst.msk [vmem:[%s397 + $0x20] sm:$0xff] %vm894, %v1837
        %1846 = vst.msk [vmem:[%s397 + $0x28] sm:$0xff] %vm894, %v1838
        %1847 = vst.msk [vmem:[%s397 + $0x30] sm:$0xff] %vm894, %v1839
        %1848 = vst.msk [vmem:[%s397 + $0x38] sm:$0xff] %vm894, %v1840
        %s1849 = sand.u32 %s262, 1
        %s1850 = scalar_lea.sflag [#allocation4], %s1849
        %s1851 = sand.u32 %s262, 1
        %s1852 = smul.addr %s1851, 64
        %s1853 = scalar_lea.vmem [#allocation3], %s1852
        // Predicated region
        $region61: #{tpu_custom_call.1} parent=59 // pred_check
          %p1854 = pneg %p272
        $region62: #{tpu_custom_call.1} parent=59 // pred_check_branch
          %1856 = sbr.rel (%p1854) target = $region64
        $region63: #{tpu_custom_call.1} parent=59 // pred_region
          %s1858 = ssub.s32 1024, 1024
          %1859 = vsyncadd %s1850, %s1858
          %s1860 = smul.addr %s24, 8
          %s1861 = smul.addr %s1860, 128
          %s1862 = scalar_lea.hbm %s10, %s1861
          %s1863 = sshll.u32 %s1853, 4
          %s1864 = int_to_ptr.vmem [resolvable:$true] %s1863
          %1869 = dma.vmem_to_hbm [thread:$0]  %s1864, 1024, %s1862, %s1850, 128, 128, 8
        $region64: #{tpu_custom_call.1} parent=59 // pred_fallthru
          _
      $region60: #{tpu_custom_call.1} parent=5 // pred_fallthru
        _
      %p1870 = scmp.le.s32.totalorder 2, %s19
      // Predicated region
      $region65: #{tpu_custom_call.1} parent=5 // pred_check
        %p1871 = pneg %p1870
      $region66: #{tpu_custom_call.1} parent=5 // pred_check_branch
        %1873 = sbr.rel (%p1871) target = $region68
      $region67: #{tpu_custom_call.1} parent=5 // pred_region
        %s1874 = ssub.s32 %s19, 2
        // Predicated region
        $region69: #{tpu_custom_call.1} parent=67 // pred_check
          %p1875 = pneg %p278
        $region70: #{tpu_custom_call.1} parent=67 // pred_check_branch
          %1877 = sbr.rel (%p1875) target = $region72
        $region71: #{tpu_custom_call.1} parent=67 // pred_region
          %s1878 = sand.u32 %s263, 1
          %s1879 = scalar_lea.sflag [#allocation4], %s1878
          %s1880 = sand.u32 %s263, 1
          %s1881 = smul.addr %s1880, 64
          %s1882 = scalar_lea.vmem [#allocation3], %s1881
          %1883 = dma.done %s1879, 1024
        $region72: #{tpu_custom_call.1} parent=67 // pred_fallthru
          _
      $region68: #{tpu_custom_call.1} parent=5 // pred_fallthru
        _
    $region6: #{tpu_custom_call.1} parent=1 // loop_footer
      %s23 = sadd.s32 1, %s19
    $region7: #{tpu_custom_call.1} parent=1 // loop_footer_branch
      %18 = sbr.rel target = $region3
    $region8: #{tpu_custom_call.1} parent=1 // loop_exit
      _
    %1884 = vsyncpa [#allocation4], 1
    %s1885 = scalar_lea.sflag [#allocation4], 1
    %1886 = vsyncpa %s1885, 1

</llo_original>
